<compile_context>
chip_gen: v7x
topology: tpu7x:2x2x1
jax: 0.10.0
libtpu: 0.0.40
codegen_flags: <defaults>
</compile_context>

<pallas_src>
import jax
import jax.numpy as jnp
from jax.experimental import pallas as pl
from jax.experimental.pallas import tpu as pltpu


def _conv_out(n, k=3, s=2):
    return (n - k) // s + 1


def _ru(n, m):
    return ((n + m - 1) // m) * m


# ----------------------------- fused Pallas kernel ---------------------------
def _make_kernel(cfg):
    (TB, M1p, OW1, OH3, OW3, C1, C2, C3, N1, E1, E2) = cfg
    # Tap offsets in the flattened layer-1 row space (row = y*OW1 + x).
    offs2 = [ky * OW1 + kx for ky in range(3) for kx in range(3)]
    offs3 = [2 * (ky * OW1 + kx) for ky in range(3) for kx in range(3)]

    def kernel(p1_ref, w1_ref, s1_ref, w2_ref, s2_ref, w3_ref, s3_ref,
               o_ref, a1_ref, z2_ref, z3_ref, p2_ref, p3_ref):
        f32 = jnp.float32

        # Zero the tap-overrun extension rows so shifted reads past the last
        # example's slab see finite, deterministic data.
        a1_ref[pl.ds(N1, E1), :] = jnp.zeros((E1, C1), dtype=jnp.bfloat16)
        z2_ref[pl.ds(N1, E2), :] = jnp.zeros((E2, C2), dtype=jnp.bfloat16)

        # ---- layer 1: ONE im2col matmul over all TB examples (M = N1) ----
        y1 = jnp.dot(p1_ref[...], w1_ref[...], preferred_element_type=f32)
        a1_ref[pl.ds(0, N1), :] = jnp.maximum(y1 + s1_ref[...], 0.0).astype(jnp.bfloat16)

        # ---- layer 2: build [N1, 9*C1] im2col in VMEM from 9 shifted
        #      contiguous row reads, then ONE matmul (K=144).  Row r of the
        #      result is the stride-1 conv at flattened layer-1 position r;
        #      only stride-2 rows are ever consumed downstream.
        for t, off in enumerate(offs2):
            p2_ref[:, t * C1:(t + 1) * C1] = a1_ref[pl.ds(off, N1), :]
        y2 = jnp.dot(p2_ref[...], w2_ref[...], preferred_element_type=f32)
        z2_ref[pl.ds(0, N1), :] = jnp.maximum(y2 + s2_ref[...], 0.0).astype(jnp.bfloat16)

        # ---- layer 3 (+ folded eval-BatchNorm): same trick; tap offsets are
        #      doubled because z2 still lives in layer-1 row coordinates.
        for t, off in enumerate(offs3):
            p3_ref[:, t * C2:(t + 1) * C2] = z2_ref[pl.ds(off, N1), :]
        y3 = jnp.dot(p3_ref[...], w3_ref[...], preferred_element_type=f32)
        z3_ref[...] = jnp.maximum(y3 + s3_ref[...], 0.0)

        # ---- extract the stride-2 conv3 outputs (stride 4 in layer-1 rows) ----
        for b in range(TB):
            base = b * M1p
            for i in range(OH3):
                if OW3 == 1:
                    rows = z3_ref[pl.ds(base + 4 * i * OW1, 1), :]
                else:
                    rows = z3_ref[pl.ds(base + 4 * i * OW1, OW3, stride=4), :]
                o_ref[b, pl.ds(i * OW3, OW3), :] = rows

    return kernel


# ------------------------------ host-side glue --------------------------------
def _im2col_l1(x_nhwc, k=3, s=2):
    """NHWC -> [B, OH*OW, k*k*C] patches, flatten order (KH, KW, C)."""
    B, H, W, C = x_nhwc.shape
    OH, OW = _conv_out(H), _conv_out(W)
    cols = []
    for ky in range(k):
        for kx in range(k):
            cols.append(x_nhwc[:, ky:ky + s * (OH - 1) + 1:s,
                               kx:kx + s * (OW - 1) + 1:s, :])
    p = jnp.concatenate(cols, axis=-1)                 # [B, OH, OW, k*k*C]
    return p.reshape(B, OH * OW, k * k * C)


def _fold_weight(w_oihw, scale=None):
    """OIHW conv weight -> [KH*KW*IC, OC] (row order KH,KW,C); fold scale; bf16."""
    OC, IC, KH, KW = w_oihw.shape
    w = jnp.transpose(w_oihw, (2, 3, 1, 0)).reshape(KH * KW * IC, OC)
    if scale is not None:
        w = w * scale[None, :]
    return w.astype(jnp.bfloat16)


def _pick_batching(B, tb_max=8):
    """TB examples per grid step; keep >= 2 grid steps for v7x's 2 TensorCores."""
    if B <= 1:
        return 1, 1
    G = max(2, -(-B // tb_max))
    TB = -(-B // G)
    G = -(-B // TB)
    return TB, G


def cnn_forward(x_nchw, p):
    x = jnp.asarray(x_nchw, jnp.float32)
    B, C, H, W = x.shape
    OH1, OW1 = _conv_out(H), _conv_out(W)
    OH2, OW2 = _conv_out(OH1), _conv_out(OW1)
    OH3, OW3 = _conv_out(OH2), _conv_out(OW2)
    C1, C2, C3 = 16, 32, 64
    assert OH3 >= 1 and OW3 >= 1, "input spatial dims too small for 3 stride-2 convs"

    M1, M3 = OH1 * OW1, OH3 * OW3
    M1p = _ru(M1, 8)                 # per-example row slab (multiple of 8)
    K1p = _ru(9 * C, 16)             # layer-1 K pad (27 -> 32): bf16 sublane packing

    TB, G = _pick_batching(B)
    B_pad = TB * G
    N1 = TB * M1p                    # matmul M for every layer
    E1 = _ru(2 * OW1 + 2, 8)         # layer-2 tap over-read past last example
    E2 = _ru(4 * OW1 + 4, 8)         # layer-3 tap over-read

    # Trace-time parameter folding (bias + eval-mode BatchNorm -> scale/shift).
    bn_scale = p["bn_gamma"] / jnp.sqrt(p["bn_var"] + p["bn_eps"])
    w1 = jnp.pad(_fold_weight(p["w1"]), ((0, K1p - 9 * C), (0, 0)))
    w2 = _fold_weight(p["w2"])
    w3 = _fold_weight(p["w3"], scale=bn_scale)
    s1 = p["b1"].reshape(1, C1).astype(jnp.float32)
    s2 = p["b2"].reshape(1, C2).astype(jnp.float32)
    s3 = ((p["b3"] - p["bn_mean"]) * bn_scale + p["bn_beta"]).reshape(1, C3).astype(jnp.float32)

    # Layer-1 im2col, example-major rows padded to M1p, K padded to K1p, bf16.
    if B_pad > B:
        x = jnp.pad(x, ((0, B_pad - B), (0, 0), (0, 0), (0, 0)))
    x_nhwc = jnp.transpose(x, (0, 2, 3, 1))
    p1 = _im2col_l1(x_nhwc)                                        # (B_pad, M1, 9C)
    p1 = jnp.pad(p1, ((0, 0), (0, M1p - M1), (0, K1p - 9 * C)))
    p1 = p1.reshape(B_pad * M1p, K1p).astype(jnp.bfloat16)

    cfg = (TB, M1p, OW1, OH3, OW3, C1, C2, C3, N1, E1, E2)
    kernel = _make_kernel(cfg)

    out = pl.pallas_call(
        kernel,
        out_shape=jax.ShapeDtypeStruct((B_pad, M3, C3), jnp.float32),
        grid=(G,),
        in_specs=[
            pl.BlockSpec((N1, K1p), lambda g: (g, 0)),        # layer-1 patches (TB examples)
            pl.BlockSpec((K1p, C1), lambda g: (0, 0)),        # w1
            pl.BlockSpec((1, C1), lambda g: (0, 0)),          # shift1
            pl.BlockSpec((9 * C1, C2), lambda g: (0, 0)),     # w2
            pl.BlockSpec((1, C2), lambda g: (0, 0)),          # shift2
            pl.BlockSpec((9 * C2, C3), lambda g: (0, 0)),     # w3 (BN scale folded)
            pl.BlockSpec((1, C3), lambda g: (0, 0)),          # shift3 (bias + BN folded)
        ],
        out_specs=pl.BlockSpec((TB, M3, C3), lambda g: (g, 0, 0)),
        scratch_shapes=[
            pltpu.VMEM((N1 + E1, C1), jnp.bfloat16),          # a1: layer-1 activations (bf16)
            pltpu.VMEM((N1 + E2, C2), jnp.bfloat16),          # z2: stride-1 layer-2 activations
            pltpu.VMEM((N1, C3), jnp.float32),                # z3: stride-1 layer-3 activations
            pltpu.VMEM((N1, 9 * C1), jnp.bfloat16),           # im2col operand, layer 2
            pltpu.VMEM((N1, 9 * C2), jnp.bfloat16),           # im2col operand, layer 3
        ],
        compiler_params=pltpu.CompilerParams(
            dimension_semantics=("parallel",),
            vmem_limit_bytes=48 * 1024 * 1024,
        ),
    )(p1, w1, s1, w2, s2, w3, s3)

    # NCHW-order flatten, matching torch `x.reshape(x.size(0), -1)`.
    out = out[:B].reshape(B, OH3, OW3, C3).transpose(0, 3, 1, 2)
    return out.reshape(B, C3 * M3)


def init_params(key, input_channels=3):
    ks = jax.random.split(key, 6)
    p = {}
    p["w1"] = 0.1 * jax.random.normal(ks[0], (16, input_channels, 3, 3), jnp.float32)
    p["b1"] = 0.1 * jax.random.normal(ks[1], (16,), jnp.float32)
    p["w2"] = 0.1 * jax.random.normal(ks[2], (32, 16, 3, 3), jnp.float32)
    p["b2"] = 0.1 * jax.random.normal(ks[3], (32,), jnp.float32)
    p["w3"] = 0.1 * jax.random.normal(ks[4], (64, 32, 3, 3), jnp.float32)
    p["b3"] = 0.1 * jax.random.normal(ks[5], (64,), jnp.float32)
    # BatchNorm2d(64) eval-mode defaults: gamma=1, beta=0, mean=0, var=1
    p["bn_gamma"] = jnp.ones((64,), jnp.float32)
    p["bn_beta"] = jnp.zeros((64,), jnp.float32)
    p["bn_mean"] = jnp.zeros((64,), jnp.float32)
    p["bn_var"] = jnp.ones((64,), jnp.float32)
    p["bn_eps"] = 1e-5
    return p


def _reference_forward(x, p):
    """Pure-JAX reference (XLA convs, f32) for a tolerance check."""
    x = x.astype(jnp.float32)
    dn = ("NCHW", "OIHW", "NCHW")
    y = jax.lax.conv_general_dilated(x, p["w1"], (2, 2), "VALID", dimension_numbers=dn)
    y = jax.nn.relu(y + p["b1"][None, :, None, None])
    y = jax.lax.conv_general_dilated(y, p["w2"], (2, 2), "VALID", dimension_numbers=dn)
    y = jax.nn.relu(y + p["b2"][None, :, None, None])
    y = jax.lax.conv_general_dilated(y, p["w3"], (2, 2), "VALID", dimension_numbers=dn)
    y = y + p["b3"][None, :, None, None]
    scale = (p["bn_gamma"] / jnp.sqrt(p["bn_var"] + p["bn_eps"]))[None, :, None, None]
    y = (y - p["bn_mean"][None, :, None, None]) * scale + p["bn_beta"][None, :, None, None]
    y = jax.nn.relu(y)
    return y.reshape(y.shape[0], -1)


if __name__ == "__main__":
    key = jax.random.PRNGKey(0)
    kx_, kp_ = jax.random.split(key)
    B, C, H, W = 4, 3, 16, 16          # spatial: 16 -> 7 -> 3 -> 1
    x = jax.random.normal(kx_, (B, C, H, W), jnp.float32)
    params = init_params(kp_, input_channels=C)

    fwd = jax.jit(cnn_forward)
    out = jax.block_until_ready(fwd(x, params))

    assert out.shape == (B, 64), out.shape
    assert out.dtype == jnp.float32

    ref = _reference_forward(x, params)
    err = float(jnp.max(jnp.abs(out - ref)))
    assert err < 5e-2, f"max abs error vs reference: {err}"

    print("KERNEL_OK")
</pallas_src>

<mosaic_0001>
module attributes {stable_mosaic.version = 11 : i64} {
  func.func @kernel(%arg0: i32, %arg1: memref<112x32xbf16, #tpu.memory_space<vmem>>, %arg2: memref<32x16xbf16, #tpu.memory_space<vmem>>, %arg3: memref<1x16xf32, #tpu.memory_space<vmem>>, %arg4: memref<144x32xbf16, #tpu.memory_space<vmem>>, %arg5: memref<1x32xf32, #tpu.memory_space<vmem>>, %arg6: memref<288x64xbf16, #tpu.memory_space<vmem>>, %arg7: memref<1x64xf32, #tpu.memory_space<vmem>>, %arg8: memref<2x1x64xf32, #tpu.memory_space<vmem>>, %arg9: memref<128x16xbf16, #tpu.memory_space<vmem>>, %arg10: memref<144x32xbf16, #tpu.memory_space<vmem>>, %arg11: memref<112x64xf32, #tpu.memory_space<vmem>>, %arg12: memref<112x144xbf16, #tpu.memory_space<vmem>>, %arg13: memref<112x288xbf16, #tpu.memory_space<vmem>>) attributes {dimension_semantics = [#tpu.dimension_semantics<parallel>], iteration_bounds = array<i64: 2>, scalar_prefetch = 0 : i64, scratch_operands = 5 : i64, tpu.core_type = #tpu.core_type<tc>, window_params = [{transform_indices = @transform_0, window_bounds = array<i64: 112, 32>}, {pipeline_mode = #tpu.pipeline_mode<synchronous>, transform_indices = @transform_1, window_bounds = array<i64: 32, 16>}, {pipeline_mode = #tpu.pipeline_mode<synchronous>, transform_indices = @transform_2, window_bounds = array<i64: 1, 16>}, {pipeline_mode = #tpu.pipeline_mode<synchronous>, transform_indices = @transform_3, window_bounds = array<i64: 144, 32>}, {pipeline_mode = #tpu.pipeline_mode<synchronous>, transform_indices = @transform_4, window_bounds = array<i64: 1, 32>}, {pipeline_mode = #tpu.pipeline_mode<synchronous>, transform_indices = @transform_5, window_bounds = array<i64: 288, 64>}, {pipeline_mode = #tpu.pipeline_mode<synchronous>, transform_indices = @transform_6, window_bounds = array<i64: 1, 64>}, {transform_indices = @transform_7, window_bounds = array<i64: 2, 1, 64>}]} {
    %cst = arith.constant 0.000000e+00 : bf16
    %0 = vector.broadcast %cst : bf16 to vector<16x16xbf16>
    %c112 = arith.constant 112 : index
    %c0 = arith.constant 0 : index
    %1 = vector.load %arg9[%c112, %c0] : memref<128x16xbf16, #tpu.memory_space<vmem>>, vector<16x16xbf16>
    tpu.vector_store %arg9[%c112, %c0], %0 {strides = array<i32>} : memref<128x16xbf16, #tpu.memory_space<vmem>>, vector<16x16xbf16>,
    %cst_0 = arith.constant 0.000000e+00 : bf16
    %2 = vector.broadcast %cst_0 : bf16 to vector<32x32xbf16>
    %c112_1 = arith.constant 112 : index
    %c0_2 = arith.constant 0 : index
    %3 = vector.load %arg10[%c112_1, %c0_2] : memref<144x32xbf16, #tpu.memory_space<vmem>>, vector<32x32xbf16>
    tpu.vector_store %arg10[%c112_1, %c0_2], %2 {strides = array<i32>} : memref<144x32xbf16, #tpu.memory_space<vmem>>, vector<32x32xbf16>,
    %c0_3 = arith.constant 0 : index
    %c0_4 = arith.constant 0 : index
    %4 = vector.load %arg1[%c0_3, %c0_4] : memref<112x32xbf16, #tpu.memory_space<vmem>>, vector<112x32xbf16>
    %c0_5 = arith.constant 0 : index
    %c0_6 = arith.constant 0 : index
    %5 = vector.load %arg2[%c0_5, %c0_6] : memref<32x16xbf16, #tpu.memory_space<vmem>>, vector<32x16xbf16>
    %cst_7 = arith.constant dense<0.000000e+00> : vector<112x16xf32>
    %6 = tpu.matmul %4, %5, %cst_7 {dimension_numbers = #tpu.dot_dimension_numbers<[1], [0], [0], [1], [0, 0, 1, 1], [], []>} : vector<112x32xbf16>, vector<32x16xbf16>, vector<112x16xf32> -> vector<112x16xf32>
    %c0_8 = arith.constant 0 : index
    %c0_9 = arith.constant 0 : index
    %7 = vector.load %arg3[%c0_8, %c0_9] : memref<1x16xf32, #tpu.memory_space<vmem>>, vector<1x16xf32>
    %8 = vector.broadcast %7 : vector<1x16xf32> to vector<112x16xf32>
    %9 = arith.addf %6, %8 : vector<112x16xf32>
    %cst_10 = arith.constant 0.000000e+00 : f32
    %10 = vector.broadcast %cst_10 : f32 to vector<112x16xf32>
    %11 = arith.maximumf %9, %10 : vector<112x16xf32>
    %12 = arith.truncf %11 : vector<112x16xf32> to vector<112x16xbf16>
    %c0_11 = arith.constant 0 : index
    %c0_12 = arith.constant 0 : index
    %13 = vector.load %arg9[%c0_11, %c0_12] : memref<128x16xbf16, #tpu.memory_space<vmem>>, vector<112x16xbf16>
    tpu.vector_store %arg9[%c0_11, %c0_12], %12 {strides = array<i32>} : memref<128x16xbf16, #tpu.memory_space<vmem>>, vector<112x16xbf16>,
    %c0_13 = arith.constant 0 : index
    %c0_14 = arith.constant 0 : index
    %14 = vector.load %arg9[%c0_13, %c0_14] : memref<128x16xbf16, #tpu.memory_space<vmem>>, vector<112x16xbf16>
    %c0_15 = arith.constant 0 : index
    %c0_16 = arith.constant 0 : index
    %15 = vector.load %arg12[%c0_15, %c0_16] : memref<112x144xbf16, #tpu.memory_space<vmem>>, vector<112x16xbf16>
    tpu.vector_store %arg12[%c0_15, %c0_16], %14 {strides = array<i32>} : memref<112x144xbf16, #tpu.memory_space<vmem>>, vector<112x16xbf16>,
    %c1 = arith.constant 1 : index
    %c0_17 = arith.constant 0 : index
    %16 = vector.load %arg9[%c1, %c0_17] : memref<128x16xbf16, #tpu.memory_space<vmem>>, vector<112x16xbf16>
    %c0_18 = arith.constant 0 : index
    %c16 = arith.constant 16 : index
    %17 = vector.load %arg12[%c0_18, %c16] : memref<112x144xbf16, #tpu.memory_space<vmem>>, vector<112x16xbf16>
    tpu.vector_store %arg12[%c0_18, %c16], %16 {strides = array<i32>} : memref<112x144xbf16, #tpu.memory_space<vmem>>, vector<112x16xbf16>,
    %c2 = arith.constant 2 : index
    %c0_19 = arith.constant 0 : index
    %18 = vector.load %arg9[%c2, %c0_19] : memref<128x16xbf16, #tpu.memory_space<vmem>>, vector<112x16xbf16>
    %c0_20 = arith.constant 0 : index
    %c32 = arith.constant 32 : index
    %19 = vector.load %arg12[%c0_20, %c32] : memref<112x144xbf16, #tpu.memory_space<vmem>>, vector<112x16xbf16>
    tpu.vector_store %arg12[%c0_20, %c32], %18 {strides = array<i32>} : memref<112x144xbf16, #tpu.memory_space<vmem>>, vector<112x16xbf16>,
    %c7 = arith.constant 7 : index
    %c0_21 = arith.constant 0 : index
    %20 = vector.load %arg9[%c7, %c0_21] : memref<128x16xbf16, #tpu.memory_space<vmem>>, vector<112x16xbf16>
    %c0_22 = arith.constant 0 : index
    %c48 = arith.constant 48 : index
    %21 = vector.load %arg12[%c0_22, %c48] : memref<112x144xbf16, #tpu.memory_space<vmem>>, vector<112x16xbf16>
    tpu.vector_store %arg12[%c0_22, %c48], %20 {strides = array<i32>} : memref<112x144xbf16, #tpu.memory_space<vmem>>, vector<112x16xbf16>,
    %c8 = arith.constant 8 : index
    %c0_23 = arith.constant 0 : index
    %22 = vector.load %arg9[%c8, %c0_23] : memref<128x16xbf16, #tpu.memory_space<vmem>>, vector<112x16xbf16>
    %c0_24 = arith.constant 0 : index
    %c64 = arith.constant 64 : index
    %23 = vector.load %arg12[%c0_24, %c64] : memref<112x144xbf16, #tpu.memory_space<vmem>>, vector<112x16xbf16>
    tpu.vector_store %arg12[%c0_24, %c64], %22 {strides = array<i32>} : memref<112x144xbf16, #tpu.memory_space<vmem>>, vector<112x16xbf16>,
    %c9 = arith.constant 9 : index
    %c0_25 = arith.constant 0 : index
    %24 = vector.load %arg9[%c9, %c0_25] : memref<128x16xbf16, #tpu.memory_space<vmem>>, vector<112x16xbf16>
    %c0_26 = arith.constant 0 : index
    %c80 = arith.constant 80 : index
    %25 = vector.load %arg12[%c0_26, %c80] : memref<112x144xbf16, #tpu.memory_space<vmem>>, vector<112x16xbf16>
    tpu.vector_store %arg12[%c0_26, %c80], %24 {strides = array<i32>} : memref<112x144xbf16, #tpu.memory_space<vmem>>, vector<112x16xbf16>,
    %c14 = arith.constant 14 : index
    %c0_27 = arith.constant 0 : index
    %26 = vector.load %arg9[%c14, %c0_27] : memref<128x16xbf16, #tpu.memory_space<vmem>>, vector<112x16xbf16>
    %c0_28 = arith.constant 0 : index
    %c96 = arith.constant 96 : index
    %27 = vector.load %arg12[%c0_28, %c96] : memref<112x144xbf16, #tpu.memory_space<vmem>>, vector<112x16xbf16>
    tpu.vector_store %arg12[%c0_28, %c96], %26 {strides = array<i32>} : memref<112x144xbf16, #tpu.memory_space<vmem>>, vector<112x16xbf16>,
    %c15 = arith.constant 15 : index
    %c0_29 = arith.constant 0 : index
    %28 = vector.load %arg9[%c15, %c0_29] : memref<128x16xbf16, #tpu.memory_space<vmem>>, vector<112x16xbf16>
    %c0_30 = arith.constant 0 : index
    %c112_31 = arith.constant 112 : index
    %29 = vector.load %arg12[%c0_30, %c112_31] : memref<112x144xbf16, #tpu.memory_space<vmem>>, vector<112x16xbf16>
    tpu.vector_store %arg12[%c0_30, %c112_31], %28 {strides = array<i32>} : memref<112x144xbf16, #tpu.memory_space<vmem>>, vector<112x16xbf16>,
    %c16_32 = arith.constant 16 : index
    %c0_33 = arith.constant 0 : index
    %30 = vector.load %arg9[%c16_32, %c0_33] : memref<128x16xbf16, #tpu.memory_space<vmem>>, vector<112x16xbf16>
    %c0_34 = arith.constant 0 : index
    %c128 = arith.constant 128 : index
    %31 = vector.load %arg12[%c0_34, %c128] : memref<112x144xbf16, #tpu.memory_space<vmem>>, vector<112x16xbf16>
    tpu.vector_store %arg12[%c0_34, %c128], %30 {strides = array<i32>} : memref<112x144xbf16, #tpu.memory_space<vmem>>, vector<112x16xbf16>,
    %c0_35 = arith.constant 0 : index
    %c0_36 = arith.constant 0 : index
    %32 = vector.load %arg12[%c0_35, %c0_36] : memref<112x144xbf16, #tpu.memory_space<vmem>>, vector<112x144xbf16>
    %c0_37 = arith.constant 0 : index
    %c0_38 = arith.constant 0 : index
    %33 = vector.load %arg4[%c0_37, %c0_38] : memref<144x32xbf16, #tpu.memory_space<vmem>>, vector<144x32xbf16>
    %cst_39 = arith.constant dense<0.000000e+00> : vector<112x32xf32>
    %34 = tpu.matmul %32, %33, %cst_39 {dimension_numbers = #tpu.dot_dimension_numbers<[1], [0], [0], [1], [0, 0, 1, 1], [], []>} : vector<112x144xbf16>, vector<144x32xbf16>, vector<112x32xf32> -> vector<112x32xf32>
    %c0_40 = arith.constant 0 : index
    %c0_41 = arith.constant 0 : index
    %35 = vector.load %arg5[%c0_40, %c0_41] : memref<1x32xf32, #tpu.memory_space<vmem>>, vector<1x32xf32>
    %36 = vector.broadcast %35 : vector<1x32xf32> to vector<112x32xf32>
    %37 = arith.addf %34, %36 : vector<112x32xf32>
    %cst_42 = arith.constant 0.000000e+00 : f32
    %38 = vector.broadcast %cst_42 : f32 to vector<112x32xf32>
    %39 = arith.maximumf %37, %38 : vector<112x32xf32>
    %40 = arith.truncf %39 : vector<112x32xf32> to vector<112x32xbf16>
    %c0_43 = arith.constant 0 : index
    %c0_44 = arith.constant 0 : index
    %41 = vector.load %arg10[%c0_43, %c0_44] : memref<144x32xbf16, #tpu.memory_space<vmem>>, vector<112x32xbf16>
    tpu.vector_store %arg10[%c0_43, %c0_44], %40 {strides = array<i32>} : memref<144x32xbf16, #tpu.memory_space<vmem>>, vector<112x32xbf16>,
    %c0_45 = arith.constant 0 : index
    %c0_46 = arith.constant 0 : index
    %42 = vector.load %arg10[%c0_45, %c0_46] : memref<144x32xbf16, #tpu.memory_space<vmem>>, vector<112x32xbf16>
    %c0_47 = arith.constant 0 : index
    %c0_48 = arith.constant 0 : index
    %43 = vector.load %arg13[%c0_47, %c0_48] : memref<112x288xbf16, #tpu.memory_space<vmem>>, vector<112x32xbf16>
    tpu.vector_store %arg13[%c0_47, %c0_48], %42 {strides = array<i32>} : memref<112x288xbf16, #tpu.memory_space<vmem>>, vector<112x32xbf16>,
    %c2_49 = arith.constant 2 : index
    %c0_50 = arith.constant 0 : index
    %44 = vector.load %arg10[%c2_49, %c0_50] : memref<144x32xbf16, #tpu.memory_space<vmem>>, vector<112x32xbf16>
    %c0_51 = arith.constant 0 : index
    %c32_52 = arith.constant 32 : index
    %45 = vector.load %arg13[%c0_51, %c32_52] : memref<112x288xbf16, #tpu.memory_space<vmem>>, vector<112x32xbf16>
    tpu.vector_store %arg13[%c0_51, %c32_52], %44 {strides = array<i32>} : memref<112x288xbf16, #tpu.memory_space<vmem>>, vector<112x32xbf16>,
    %c4 = arith.constant 4 : index
    %c0_53 = arith.constant 0 : index
    %46 = vector.load %arg10[%c4, %c0_53] : memref<144x32xbf16, #tpu.memory_space<vmem>>, vector<112x32xbf16>
    %c0_54 = arith.constant 0 : index
    %c64_55 = arith.constant 64 : index
    %47 = vector.load %arg13[%c0_54, %c64_55] : memref<112x288xbf16, #tpu.memory_space<vmem>>, vector<112x32xbf16>
    tpu.vector_store %arg13[%c0_54, %c64_55], %46 {strides = array<i32>} : memref<112x288xbf16, #tpu.memory_space<vmem>>, vector<112x32xbf16>,
    %c14_56 = arith.constant 14 : index
    %c0_57 = arith.constant 0 : index
    %48 = vector.load %arg10[%c14_56, %c0_57] : memref<144x32xbf16, #tpu.memory_space<vmem>>, vector<112x32xbf16>
    %c0_58 = arith.constant 0 : index
    %c96_59 = arith.constant 96 : index
    %49 = vector.load %arg13[%c0_58, %c96_59] : memref<112x288xbf16, #tpu.memory_space<vmem>>, vector<112x32xbf16>
    tpu.vector_store %arg13[%c0_58, %c96_59], %48 {strides = array<i32>} : memref<112x288xbf16, #tpu.memory_space<vmem>>, vector<112x32xbf16>,
    %c16_60 = arith.constant 16 : index
    %c0_61 = arith.constant 0 : index
    %50 = vector.load %arg10[%c16_60, %c0_61] : memref<144x32xbf16, #tpu.memory_space<vmem>>, vector<112x32xbf16>
    %c0_62 = arith.constant 0 : index
    %c128_63 = arith.constant 128 : index
    %51 = vector.load %arg13[%c0_62, %c128_63] : memref<112x288xbf16, #tpu.memory_space<vmem>>, vector<112x32xbf16>
    tpu.vector_store %arg13[%c0_62, %c128_63], %50 {strides = array<i32>} : memref<112x288xbf16, #tpu.memory_space<vmem>>, vector<112x32xbf16>,
    %c18 = arith.constant 18 : index
    %c0_64 = arith.constant 0 : index
    %52 = vector.load %arg10[%c18, %c0_64] : memref<144x32xbf16, #tpu.memory_space<vmem>>, vector<112x32xbf16>
    %c0_65 = arith.constant 0 : index
    %c160 = arith.constant 160 : index
    %53 = vector.load %arg13[%c0_65, %c160] : memref<112x288xbf16, #tpu.memory_space<vmem>>, vector<112x32xbf16>
    tpu.vector_store %arg13[%c0_65, %c160], %52 {strides = array<i32>} : memref<112x288xbf16, #tpu.memory_space<vmem>>, vector<112x32xbf16>,
    %c28 = arith.constant 28 : index
    %c0_66 = arith.constant 0 : index
    %54 = vector.load %arg10[%c28, %c0_66] : memref<144x32xbf16, #tpu.memory_space<vmem>>, vector<112x32xbf16>
    %c0_67 = arith.constant 0 : index
    %c192 = arith.constant 192 : index
    %55 = vector.load %arg13[%c0_67, %c192] : memref<112x288xbf16, #tpu.memory_space<vmem>>, vector<112x32xbf16>
    tpu.vector_store %arg13[%c0_67, %c192], %54 {strides = array<i32>} : memref<112x288xbf16, #tpu.memory_space<vmem>>, vector<112x32xbf16>,
    %c30 = arith.constant 30 : index
    %c0_68 = arith.constant 0 : index
    %56 = vector.load %arg10[%c30, %c0_68] : memref<144x32xbf16, #tpu.memory_space<vmem>>, vector<112x32xbf16>
    %c0_69 = arith.constant 0 : index
    %c224 = arith.constant 224 : index
    %57 = vector.load %arg13[%c0_69, %c224] : memref<112x288xbf16, #tpu.memory_space<vmem>>, vector<112x32xbf16>
    tpu.vector_store %arg13[%c0_69, %c224], %56 {strides = array<i32>} : memref<112x288xbf16, #tpu.memory_space<vmem>>, vector<112x32xbf16>,
    %c32_70 = arith.constant 32 : index
    %c0_71 = arith.constant 0 : index
    %58 = vector.load %arg10[%c32_70, %c0_71] : memref<144x32xbf16, #tpu.memory_space<vmem>>, vector<112x32xbf16>
    %c0_72 = arith.constant 0 : index
    %c256 = arith.constant 256 : index
    %59 = vector.load %arg13[%c0_72, %c256] : memref<112x288xbf16, #tpu.memory_space<vmem>>, vector<112x32xbf16>
    tpu.vector_store %arg13[%c0_72, %c256], %58 {strides = array<i32>} : memref<112x288xbf16, #tpu.memory_space<vmem>>, vector<112x32xbf16>,
    %c0_73 = arith.constant 0 : index
    %c0_74 = arith.constant 0 : index
    %60 = vector.load %arg13[%c0_73, %c0_74] : memref<112x288xbf16, #tpu.memory_space<vmem>>, vector<112x288xbf16>
    %c0_75 = arith.constant 0 : index
    %c0_76 = arith.constant 0 : index
    %61 = vector.load %arg6[%c0_75, %c0_76] : memref<288x64xbf16, #tpu.memory_space<vmem>>, vector<288x64xbf16>
    %cst_77 = arith.constant dense<0.000000e+00> : vector<112x64xf32>
    %62 = tpu.matmul %60, %61, %cst_77 {dimension_numbers = #tpu.dot_dimension_numbers<[1], [0], [0], [1], [0, 0, 1, 1], [], []>} : vector<112x288xbf16>, vector<288x64xbf16>, vector<112x64xf32> -> vector<112x64xf32>
    %c0_78 = arith.constant 0 : index
    %c0_79 = arith.constant 0 : index
    %63 = vector.load %arg7[%c0_78, %c0_79] : memref<1x64xf32, #tpu.memory_space<vmem>>, vector<1x64xf32>
    %64 = vector.broadcast %63 : vector<1x64xf32> to vector<112x64xf32>
    %65 = arith.addf %62, %64 : vector<112x64xf32>
    %cst_80 = arith.constant 0.000000e+00 : f32
    %66 = vector.broadcast %cst_80 : f32 to vector<112x64xf32>
    %67 = arith.maximumf %65, %66 : vector<112x64xf32>
    %c0_81 = arith.constant 0 : index
    %c0_82 = arith.constant 0 : index
    %68 = vector.load %arg11[%c0_81, %c0_82] : memref<112x64xf32, #tpu.memory_space<vmem>>, vector<112x64xf32>
    tpu.vector_store %arg11[%c0_81, %c0_82], %67 {strides = array<i32>} : memref<112x64xf32, #tpu.memory_space<vmem>>, vector<112x64xf32>,
    %c0_83 = arith.constant 0 : index
    %c0_84 = arith.constant 0 : index
    %69 = vector.load %arg11[%c0_83, %c0_84] : memref<112x64xf32, #tpu.memory_space<vmem>>, vector<1x64xf32>
    %c0_85 = arith.constant 0 : index
    %c0_86 = arith.constant 0 : index
    %c0_87 = arith.constant 0 : index
    %70 = vector.load %arg8[%c0_85, %c0_86, %c0_87] : memref<2x1x64xf32, #tpu.memory_space<vmem>>, vector<1x1x64xf32>
    %71 = vector.shape_cast %70 : vector<1x1x64xf32> to vector<1x64xf32>
    %72 = vector.shape_cast %69 : vector<1x64xf32> to vector<1x1x64xf32>
    tpu.vector_store %arg8[%c0_85, %c0_86, %c0_87], %72 {strides = array<i32>} : memref<2x1x64xf32, #tpu.memory_space<vmem>>, vector<1x1x64xf32>,
    %c56 = arith.constant 56 : index
    %c0_88 = arith.constant 0 : index
    %73 = vector.load %arg11[%c56, %c0_88] : memref<112x64xf32, #tpu.memory_space<vmem>>, vector<1x64xf32>
    %c1_89 = arith.constant 1 : index
    %c0_90 = arith.constant 0 : index
    %c0_91 = arith.constant 0 : index
    %74 = vector.load %arg8[%c1_89, %c0_90, %c0_91] : memref<2x1x64xf32, #tpu.memory_space<vmem>>, vector<1x1x64xf32>
    %75 = vector.shape_cast %74 : vector<1x1x64xf32> to vector<1x64xf32>
    %76 = vector.shape_cast %73 : vector<1x64xf32> to vector<1x1x64xf32>
    tpu.vector_store %arg8[%c1_89, %c0_90, %c0_91], %76 {strides = array<i32>} : memref<2x1x64xf32, #tpu.memory_space<vmem>>, vector<1x1x64xf32>,
    return
  }
  func.func @transform_0(%arg0: i32) -> (i32, i32) {
    %c0_i32 = arith.constant 0 : i32
    %c0_i32_0 = arith.constant 0 : i32
    return %arg0, %c0_i32 : i32, i32
  }
  func.func @transform_1(%arg0: i32) -> (i32, i32) {
    %c0_i32 = arith.constant 0 : i32
    %c0_i32_0 = arith.constant 0 : i32
    %c0_i32_1 = arith.constant 0 : i32
    return %c0_i32, %c0_i32_0 : i32, i32
  }
  func.func @transform_2(%arg0: i32) -> (i32, i32) {
    %c0_i32 = arith.constant 0 : i32
    %c0_i32_0 = arith.constant 0 : i32
    %c0_i32_1 = arith.constant 0 : i32
    return %c0_i32, %c0_i32_0 : i32, i32
  }
  func.func @transform_3(%arg0: i32) -> (i32, i32) {
    %c0_i32 = arith.constant 0 : i32
    %c0_i32_0 = arith.constant 0 : i32
    %c0_i32_1 = arith.constant 0 : i32
    return %c0_i32, %c0_i32_0 : i32, i32
  }
  func.func @transform_4(%arg0: i32) -> (i32, i32) {
    %c0_i32 = arith.constant 0 : i32
    %c0_i32_0 = arith.constant 0 : i32
    %c0_i32_1 = arith.constant 0 : i32
    return %c0_i32, %c0_i32_0 : i32, i32
  }
  func.func @transform_5(%arg0: i32) -> (i32, i32) {
    %c0_i32 = arith.constant 0 : i32
    %c0_i32_0 = arith.constant 0 : i32
    %c0_i32_1 = arith.constant 0 : i32
    return %c0_i32, %c0_i32_0 : i32, i32
  }
  func.func @transform_6(%arg0: i32) -> (i32, i32) {
    %c0_i32 = arith.constant 0 : i32
    %c0_i32_0 = arith.constant 0 : i32
    %c0_i32_1 = arith.constant 0 : i32
    return %c0_i32, %c0_i32_0 : i32, i32
  }
  func.func @transform_7(%arg0: i32) -> (i32, i32, i32) {
    %c0_i32 = arith.constant 0 : i32
    %c0_i32_0 = arith.constant 0 : i32
    %c0_i32_1 = arith.constant 0 : i32
    return %arg0, %c0_i32, %c0_i32_0 : i32, i32, i32
  }
}

</mosaic_0001>

<llo_original>
// kernel: cnn_forward.1
$region0: #{cnn_forward.1}
  #allocation0 [shape = 'u32[]', space=smem, size = 0x4, offset = 0x4, fixed_abs, tag = 'smem constant byte address 0x4 - core index']
  #allocation1 [shape = 'u32[144,128]{1,0:T(1,128)}', space=vmem, size = 0x12000, scoped, tag = 'internal scratch']
  #allocation2 [shape = 'bf16[128,16]{1,0:T(16,128)(2,1)}', space=vmem, size = 0x8000, scoped, tag = 'scratch operand']
  #allocation3 [shape = 'bf16[144,32]{1,0:T(16,128)(2,1)}', space=vmem, size = 0x9000, scoped, tag = 'scratch operand']
  #allocation4 [shape = 'f32[112,64]{1,0:T(8,128)}', space=vmem, size = 0xe000, scoped, tag = 'scratch operand']
  #allocation5 [shape = 'bf16[112,144]{1,0:T(16,128)(2,1)}', space=vmem, size = 0xe000, scoped, tag = 'scratch operand']
  #allocation6 [shape = 'bf16[112,288]{1,0:T(16,128)(2,1)}', space=vmem, size = 0x15000, scoped, tag = 'scratch operand']
  %s0 = inlined_call_operand.vmem [shape: bf16[224,32], index: 0, kind: input, shape index: {}]
  %s1 = inlined_call_operand.vmem [shape: bf16[32,16], index: 1, kind: input, shape index: {}]
  %s2 = inlined_call_operand.vmem [shape: f32[1,16], index: 2, kind: input, shape index: {}]
  %s3 = inlined_call_operand.vmem [shape: bf16[144,32], index: 3, kind: input, shape index: {}]
  %s4 = inlined_call_operand.vmem [shape: f32[1,32], index: 4, kind: input, shape index: {}]
  %s5 = inlined_call_operand.vmem [shape: bf16[288,64], index: 5, kind: input, shape index: {}]
  %s6 = inlined_call_operand.vmem [shape: f32[1,64], index: 6, kind: input, shape index: {}]
  %s7 = inlined_call_operand.hbm [shape: f32[4,1,64], index: 7, kind: output, shape index: {}]
  %s8 = sld [smem:[#allocation0]]
  $region61: #{cnn_forward.1} parent=0
    _
  %s10 = ssub.s32 1, %s8
  %s11 = scalar_select 0, %s10, %s8
  $region1: #{cnn_forward.1} parent=0
    #allocation7 [shape = 'u8[2048]{0}', space=vmem, size = 0x800, scoped, tag = 'output window, operand 0']
    #allocation8 [shape = 's32[2]{0}', space=sflag, size = 0x8, scoped, tag = 'scoped memory for cnn_forward.1']
    %12 = vsyncpa [#allocation8], 0
    %s13 = scalar_lea.sflag [#allocation8], 1
    %14 = vsyncpa %s13, 0
    loop: start=0, step=1, limit=4
    $region2: #{cnn_forward.1} parent=1 // loop_pre_header
      _
    $region3: #{cnn_forward.1} parent=1 // loop_header
      %s16 = sphi 0, %s20
      %p17 = scmp.ge.s32.totalorder %s16, 4
      %s26 = sphi 0, %s28
      %s29 = sphi 0, %s26
      %s30 = sphi 0, %s29
      %s46 = sphi 0, %s30
      %s50 = sphi 0, %s50
      %s52 = sphi 0, %s50
      %s53 = sphi 0, %s52
      %s67 = sphi 0, %s53
      %s71 = sphi 0, %s71
      %s73 = sphi 0, %s71
      %s74 = sphi 0, %s73
      %s88 = sphi 0, %s74
      %s92 = sphi 0, %s92
      %s94 = sphi 0, %s92
      %s95 = sphi 0, %s94
      %s109 = sphi 0, %s95
      %s113 = sphi 0, %s113
      %s115 = sphi 0, %s113
      %s116 = sphi 0, %s115
      %s130 = sphi 0, %s116
      %s134 = sphi 0, %s134
      %s136 = sphi 0, %s134
      %s137 = sphi 0, %s136
      %s151 = sphi 0, %s137
      %s155 = sphi 0, %s155
      %s157 = sphi 0, %s155
      %s158 = sphi 0, %s157
      %s172 = sphi 0, %s158
      %s178 = sphi 0, %s180
      %s181 = sphi 0, %s178
      %s182 = sphi 0, %s181
      %s198 = sphi 0, %s182
    $region4: #{cnn_forward.1} parent=1 // loop_header_branch
      %19 = sbr.rel (%p17) target = $region8
    $region5: #{cnn_forward.1} parent=1 // loop_body
      %s21 = ssub.s32 %s16, 1
      %s22 = ssub.s32 %s16, 2
      %s23 = sadd.s32 %s16, 1
      %s24 = ssub.s32 %s16, %s23
      %p25 = scmp.eq.s32.totalorder %s24, 0
      %s27 = sadd.s32 %s26, 1
      %s28 = scalar_select %p25, %s26, %s27
      %p31 = pneg %p25
      %p32 = scmp.eq.s32.totalorder %s16, 1
      %p33 = por %p31, %p32
      %p34 = scmp.ne.s32.totalorder %s26, %s29
      %p35 = scmp.eq.s32.totalorder %s16, 0
      %p36 = por %p34, %p35
      %p37 = scmp.ne.s32.totalorder %s26, %s29
      %p38 = scmp.eq.s32.totalorder %s21, 1
      %p39 = por %p37, %p38
      %p40 = scmp.ne.s32.totalorder %s29, %s30
      %p41 = scmp.eq.s32.totalorder %s21, 0
      %p42 = por %p40, %p41
      %p43 = scmp.ne.s32.totalorder %s29, %s30
      %p44 = scmp.eq.s32.totalorder %s22, 1
      %p45 = por %p43, %p44
      %p47 = scmp.ne.s32.totalorder %s30, %s46
      %p48 = scmp.eq.s32.totalorder %s22, 0
      %p49 = por %p47, %p48
      %s51 = sadd.s32 %s50, 1
      %p54 = scmp.eq.s32.totalorder %s16, 1
      %p55 = scmp.ne.s32.totalorder %s50, %s52
      %p56 = scmp.eq.s32.totalorder %s16, 0
      %p57 = por %p55, %p56
      %p58 = scmp.ne.s32.totalorder %s50, %s52
      %p59 = scmp.eq.s32.totalorder %s21, 1
      %p60 = por %p58, %p59
      %p61 = scmp.ne.s32.totalorder %s52, %s53
      %p62 = scmp.eq.s32.totalorder %s21, 0
      %p63 = por %p61, %p62
      %p64 = scmp.ne.s32.totalorder %s52, %s53
      %p65 = scmp.eq.s32.totalorder %s22, 1
      %p66 = por %p64, %p65
      %p68 = scmp.ne.s32.totalorder %s53, %s67
      %p69 = scmp.eq.s32.totalorder %s22, 0
      %p70 = por %p68, %p69
      %s72 = sadd.s32 %s71, 1
      %p75 = scmp.eq.s32.totalorder %s16, 1
      %p76 = scmp.ne.s32.totalorder %s71, %s73
      %p77 = scmp.eq.s32.totalorder %s16, 0
      %p78 = por %p76, %p77
      %p79 = scmp.ne.s32.totalorder %s71, %s73
      %p80 = scmp.eq.s32.totalorder %s21, 1
      %p81 = por %p79, %p80
      %p82 = scmp.ne.s32.totalorder %s73, %s74
      %p83 = scmp.eq.s32.totalorder %s21, 0
      %p84 = por %p82, %p83
      %p85 = scmp.ne.s32.totalorder %s73, %s74
      %p86 = scmp.eq.s32.totalorder %s22, 1
      %p87 = por %p85, %p86
      %p89 = scmp.ne.s32.totalorder %s74, %s88
      %p90 = scmp.eq.s32.totalorder %s22, 0
      %p91 = por %p89, %p90
      %s93 = sadd.s32 %s92, 1
      %p96 = scmp.eq.s32.totalorder %s16, 1
      %p97 = scmp.ne.s32.totalorder %s92, %s94
      %p98 = scmp.eq.s32.totalorder %s16, 0
      %p99 = por %p97, %p98
      %p100 = scmp.ne.s32.totalorder %s92, %s94
      %p101 = scmp.eq.s32.totalorder %s21, 1
      %p102 = por %p100, %p101
      %p103 = scmp.ne.s32.totalorder %s94, %s95
      %p104 = scmp.eq.s32.totalorder %s21, 0
      %p105 = por %p103, %p104
      %p106 = scmp.ne.s32.totalorder %s94, %s95
      %p107 = scmp.eq.s32.totalorder %s22, 1
      %p108 = por %p106, %p107
      %p110 = scmp.ne.s32.totalorder %s95, %s109
      %p111 = scmp.eq.s32.totalorder %s22, 0
      %p112 = por %p110, %p111
      %s114 = sadd.s32 %s113, 1
      %p117 = scmp.eq.s32.totalorder %s16, 1
      %p118 = scmp.ne.s32.totalorder %s113, %s115
      %p119 = scmp.eq.s32.totalorder %s16, 0
      %p120 = por %p118, %p119
      %p121 = scmp.ne.s32.totalorder %s113, %s115
      %p122 = scmp.eq.s32.totalorder %s21, 1
      %p123 = por %p121, %p122
      %p124 = scmp.ne.s32.totalorder %s115, %s116
      %p125 = scmp.eq.s32.totalorder %s21, 0
      %p126 = por %p124, %p125
      %p127 = scmp.ne.s32.totalorder %s115, %s116
      %p128 = scmp.eq.s32.totalorder %s22, 1
      %p129 = por %p127, %p128
      %p131 = scmp.ne.s32.totalorder %s116, %s130
      %p132 = scmp.eq.s32.totalorder %s22, 0
      %p133 = por %p131, %p132
      %s135 = sadd.s32 %s134, 1
      %p138 = scmp.eq.s32.totalorder %s16, 1
      %p139 = scmp.ne.s32.totalorder %s134, %s136
      %p140 = scmp.eq.s32.totalorder %s16, 0
      %p141 = por %p139, %p140
      %p142 = scmp.ne.s32.totalorder %s134, %s136
      %p143 = scmp.eq.s32.totalorder %s21, 1
      %p144 = por %p142, %p143
      %p145 = scmp.ne.s32.totalorder %s136, %s137
      %p146 = scmp.eq.s32.totalorder %s21, 0
      %p147 = por %p145, %p146
      %p148 = scmp.ne.s32.totalorder %s136, %s137
      %p149 = scmp.eq.s32.totalorder %s22, 1
      %p150 = por %p148, %p149
      %p152 = scmp.ne.s32.totalorder %s137, %s151
      %p153 = scmp.eq.s32.totalorder %s22, 0
      %p154 = por %p152, %p153
      %s156 = sadd.s32 %s155, 1
      %p159 = scmp.eq.s32.totalorder %s16, 1
      %p160 = scmp.ne.s32.totalorder %s155, %s157
      %p161 = scmp.eq.s32.totalorder %s16, 0
      %p162 = por %p160, %p161
      %p163 = scmp.ne.s32.totalorder %s155, %s157
      %p164 = scmp.eq.s32.totalorder %s21, 1
      %p165 = por %p163, %p164
      %p166 = scmp.ne.s32.totalorder %s157, %s158
      %p167 = scmp.eq.s32.totalorder %s21, 0
      %p168 = por %p166, %p167
      %p169 = scmp.ne.s32.totalorder %s157, %s158
      %p170 = scmp.eq.s32.totalorder %s22, 1
      %p171 = por %p169, %p170
      %p173 = scmp.ne.s32.totalorder %s158, %s172
      %p174 = scmp.eq.s32.totalorder %s22, 0
      %p175 = por %p173, %p174
      %s176 = ssub.s32 %s16, %s23
      %p177 = scmp.eq.s32.totalorder %s176, 0
      %s179 = sadd.s32 %s178, 1
      %s180 = scalar_select %p177, %s178, %s179
      %p183 = pneg %p177
      %p184 = scmp.eq.s32.totalorder %s16, 1
      %p185 = por %p183, %p184
      %p186 = scmp.ne.s32.totalorder %s178, %s181
      %p187 = scmp.eq.s32.totalorder %s16, 0
      %p188 = por %p186, %p187
      %p189 = scmp.ne.s32.totalorder %s178, %s181
      %p190 = scmp.eq.s32.totalorder %s21, 1
      %p191 = por %p189, %p190
      %p192 = scmp.ne.s32.totalorder %s181, %s182
      %p193 = scmp.eq.s32.totalorder %s21, 0
      %p194 = por %p192, %p193
      %p195 = scmp.ne.s32.totalorder %s181, %s182
      %p196 = scmp.eq.s32.totalorder %s22, 1
      %p197 = por %p195, %p196
      %p199 = scmp.ne.s32.totalorder %s182, %s198
      %p200 = scmp.eq.s32.totalorder %s22, 0
      %p201 = por %p199, %p200
      %p202 = scmp.le.s32.totalorder 1, %s16
      %p203 = scmp.lt.s32.totalorder %s16, 3
      %p204 = pnand %p202, %p203
      %p205 = pneg %p204
      // Predicated region
      $region9: #{cnn_forward.1} parent=5 // pred_check
        _
      $region10: #{cnn_forward.1} parent=5 // pred_check_branch
        %207 = sbr.rel (%p204) target = $region12
      $region11: #{cnn_forward.1} parent=5 // pred_region
        %s208 = ssub.s32 %s16, 1
        // Predicated region
        $region13: #{cnn_forward.1} parent=11 // pred_check
          %p209 = pneg %p63
        $region14: #{cnn_forward.1} parent=11 // pred_check_branch
          %211 = sbr.rel (%p209) target = $region16
        $region15: #{cnn_forward.1} parent=11 // pred_region
          _
        $region16: #{cnn_forward.1} parent=11 // pred_fallthru
          _
        // Predicated region
        $region17: #{cnn_forward.1} parent=11 // pred_check
          %p212 = pneg %p84
        $region18: #{cnn_forward.1} parent=11 // pred_check_branch
          %214 = sbr.rel (%p212) target = $region20
        $region19: #{cnn_forward.1} parent=11 // pred_region
          _
        $region20: #{cnn_forward.1} parent=11 // pred_fallthru
          _
        // Predicated region
        $region21: #{cnn_forward.1} parent=11 // pred_check
          %p215 = pneg %p105
        $region22: #{cnn_forward.1} parent=11 // pred_check_branch
          %217 = sbr.rel (%p215) target = $region24
        $region23: #{cnn_forward.1} parent=11 // pred_region
          _
        $region24: #{cnn_forward.1} parent=11 // pred_fallthru
          _
        // Predicated region
        $region25: #{cnn_forward.1} parent=11 // pred_check
          %p218 = pneg %p126
        $region26: #{cnn_forward.1} parent=11 // pred_check_branch
          %220 = sbr.rel (%p218) target = $region28
        $region27: #{cnn_forward.1} parent=11 // pred_region
          _
        $region28: #{cnn_forward.1} parent=11 // pred_fallthru
          _
        // Predicated region
        $region29: #{cnn_forward.1} parent=11 // pred_check
          %p221 = pneg %p147
        $region30: #{cnn_forward.1} parent=11 // pred_check_branch
          %223 = sbr.rel (%p221) target = $region32
        $region31: #{cnn_forward.1} parent=11 // pred_region
          _
        $region32: #{cnn_forward.1} parent=11 // pred_fallthru
          _
        // Predicated region
        $region33: #{cnn_forward.1} parent=11 // pred_check
          %p224 = pneg %p168
        $region34: #{cnn_forward.1} parent=11 // pred_check_branch
          %226 = sbr.rel (%p224) target = $region36
        $region35: #{cnn_forward.1} parent=11 // pred_region
          _
        $region36: #{cnn_forward.1} parent=11 // pred_fallthru
          _
      $region12: #{cnn_forward.1} parent=5 // pred_fallthru
        _
      %p227 = scmp.lt.s32.totalorder %s16, 2
      // Predicated region
      $region37: #{cnn_forward.1} parent=5 // pred_check
        %p228 = pneg %p227
      $region38: #{cnn_forward.1} parent=5 // pred_check_branch
        %230 = sbr.rel (%p228) target = $region40
      $region39: #{cnn_forward.1} parent=5 // pred_region
        // Predicated region
        $region41: #{cnn_forward.1} parent=39 // pred_check
          %p231 = pneg %p36
        $region42: #{cnn_forward.1} parent=39 // pred_check_branch
          %233 = sbr.rel (%p231) target = $region44
        $region43: #{cnn_forward.1} parent=39 // pred_region
          %s234 = smul.u32 14, %s16
          %p235 = scmp.lt.s32.totalorder %s234, 27
          %s236 = scalar_select %p235, %s234, 27
          %s237 = smul.addr %s236, 4
          %s238 = scalar_lea.vmem %s0, %s237
          %s239 = smul.u32 14, %s16
        $region44: #{cnn_forward.1} parent=39 // pred_fallthru
          _
      $region40: #{cnn_forward.1} parent=5 // pred_fallthru
        _
      %p240 = scmp.le.s32.totalorder 1, %s16
      %p241 = scmp.lt.s32.totalorder %s16, 3
      %p242 = pnand %p240, %p241
      %p243 = pneg %p242
      // Predicated region
      $region45: #{cnn_forward.1} parent=5 // pred_check
        _
      $region46: #{cnn_forward.1} parent=5 // pred_check_branch
        %245 = sbr.rel (%p242) target = $region48
      $region47: #{cnn_forward.1} parent=5 // pred_region
        %s246 = ssub.s32 %s16, 1
        %s247 = smul.u32 14, %s21
        %p248 = scmp.lt.s32.totalorder %s247, 27
        %s249 = scalar_select %p248, %s247, 27
        %s250 = smul.addr %s249, 4
        %s251 = scalar_lea.vmem %s0, %s250
        %p252 = pneg %p42
        %p253 = pneg %p39
        %p254 = pneg %p63
        %p255 = pneg %p60
        %p256 = pneg %p84
        %p257 = pneg %p81
        %p258 = pneg %p105
        %p259 = pneg %p102
        %p260 = pneg %p126
        %p261 = pneg %p123
        %p262 = pneg %p147
        %p263 = pneg %p144
        %p264 = pneg %p168
        %p265 = pneg %p165
        %p266 = pneg %p194
        %p267 = pneg %p191
        %s268 = sand.u32 %s181, 1
        %s269 = scalar_lea.sflag [#allocation8], %s268
        %s270 = sand.u32 %s181, 1
        %s271 = smul.addr %s270, 2
        %s272 = scalar_lea.vmem [#allocation7], %s271
        %s273 = smul.u32 14, %s21
        %p274 = scmp.lt.s32.totalorder %s273, 27
        %s275 = scalar_select %p274, %s273, 27
        %s276 = smul.addr %s275, 4
        %s277 = scalar_lea.vmem %s0, %s276
        %s278 = smul.u32 14, %s21
        %s279 = smul.u32 2, %s21
        %vm281 = vcmask 130048
        %282 = vst.msk [vmem:[#allocation2 + $0x38] sm:$0xff] %vm281, 0
        %vm283 = vcmask 261120
        %284 = vst.msk [vmem:[#allocation3 + $0x38] sm:$0xff] %vm283, 0
        %285 = vst.msk [vmem:[#allocation3 + $0x40] sm:$0xff] %vm283, 0
        %v286 = vld [vmem:[%s277] sm:$0xf]
        %v287 = vld [vmem:[%s277 + $0x4] sm:$0xf]
        %v288 = vld [vmem:[%s277 + $0x8] sm:$0xf]
        %v289 = vld [vmem:[%s277 + $0xc] sm:$0xf]
        %v290 = vld [vmem:[%s277 + $0x10] sm:$0xf]
        %v291 = vld [vmem:[%s277 + $0x14] sm:$0xf]
        %v292 = vld [vmem:[%s277 + $0x18] sm:$0xf]
        %v293 = vld [vmem:[%s277 + $0x1c] sm:$0xf]
        %v294 = vld [vmem:[%s277 + $0x20] sm:$0xf]
        %v295 = vld [vmem:[%s277 + $0x24] sm:$0xf]
        %v296 = vld [vmem:[%s277 + $0x28] sm:$0xf]
        %v297 = vld [vmem:[%s277 + $0x2c] sm:$0xf]
        %v298 = vld [vmem:[%s277 + $0x30] sm:$0xf]
        %v299 = vld [vmem:[%s277 + $0x34] sm:$0xf]
        %v300 = vld [vmem:[%s1] sm:$0xf]
        %v301 = vld [vmem:[%s1 + $0x4] sm:$0xf]
        %v302 = vld [vmem:[%s1 + $0x8] sm:$0xf]
        %v303 = vld [vmem:[%s1 + $0xc] sm:$0xf]
        %v304 = vld [vmem:[%s2] sm:$0x1]
        %v306 = vlaneseq
        %v307 = vshrl.u32 %v306, 7
        %v308 = vsub.s32 0, %v307
        %v309 = vrot.slane %v304, %v308
        %v325 = vunpack.c.l.b16 %v286
        %v326 = vunpack.c.l.b16 %v287
        %v327 = vunpack.c.l.b16 %v288
        %v328 = vunpack.c.l.b16 %v289
        %v329 = vunpack.c.l.b16 %v290
        %v330 = vunpack.c.l.b16 %v291
        %v331 = vunpack.c.l.b16 %v292
        %v332 = vunpack.c.l.b16 %v293
        %v333 = vunpack.c.l.b16 %v294
        %v334 = vunpack.c.l.b16 %v295
        %v335 = vunpack.c.l.b16 %v296
        %v336 = vunpack.c.l.b16 %v297
        %v337 = vunpack.c.l.b16 %v298
        %v338 = vunpack.c.l.b16 %v299
        %v339 = vpack.c.b16 %v326, %v325
        %v340 = vpack.c.b16 %v328, %v327
        %v341 = vpack.c.b16 %v330, %v329
        %v342 = vpack.c.b16 %v332, %v331
        %v343 = vpack.c.b16 %v334, %v333
        %v344 = vpack.c.b16 %v336, %v335
        %v345 = vpack.c.b16 %v338, %v337
        %v350 = vunpack.c.l.b16 %v300
        %v351 = vunpack.c.l.b16 %v301
        %v352 = vunpack.c.l.b16 %v302
        %v353 = vunpack.c.l.b16 %v303
        %v354 = vpack.c.b16 %v351, %v350
        %v355 = vpack.c.b16 %v353, %v352
        %v359 = vsel %vm283, %v339, 0
        %v362 = vsel %vm283, %v340, 0
        %v365 = vsel %vm283, %v341, 0
        %v368 = vsel %vm283, %v342, 0
        %v371 = vsel %vm283, %v343, 0
        %v374 = vsel %vm283, %v344, 0
        %v377 = vsel %vm283, %v345, 0
        %379 = vmatprep.subr.bf16.mxu0 0
        %380 = vmatpush1.bf16.msra.mxu0 %v354
        %381 = vmatprep.subr.bf16.mxu0 0
        %382 = vmatpush1.bf16.msra.mxu0 %v355
        %383 = vmatprep.subr.bf16.mxu0 0
        %384 = vmatpush1.bf16.msra.mxu0 0
        %385 = vmatprep.subr.bf16.mxu0 0
        %386 = vmatpush1.bf16.msra.mxu0 0
        %387 = vmatprep.subr.bf16.mxu0 0
        %388 = vmatpush1.bf16.msra.mxu0 0
        %389 = vmatprep.subr.bf16.mxu0 0
        %390 = vmatpush1.bf16.msra.mxu0 0
        %391 = vmatprep.subr.bf16.mxu0 0
        %392 = vmatpush1.bf16.msra.mxu0 0
        %393 = vmatprep.subr.bf16.mxu0 0
        %394 = vmatpush1.bf16.msra.mxu0 0
        %395 = vmatprep.subr.bf16.mxu0 0
        %396 = vmatpush1.bf16.msra.mxu0 0
        %397 = vmatprep.subr.bf16.mxu0 0
        %398 = vmatpush1.bf16.msra.mxu0 0
        %399 = vmatprep.subr.bf16.mxu0 0
        %400 = vmatpush1.bf16.msra.mxu0 0
        %401 = vmatprep.subr.bf16.mxu0 0
        %402 = vmatpush1.bf16.msra.mxu0 0
        %403 = vmatprep.subr.bf16.mxu0 0
        %404 = vmatpush1.bf16.msra.mxu0 0
        %405 = vmatprep.subr.bf16.mxu0 0
        %406 = vmatpush1.bf16.msra.mxu0 0
        %407 = vmatprep.subr.bf16.mxu0 0
        %408 = vmatpush1.bf16.msra.mxu0 0
        %409 = vmatprep.subr.bf16.mxu0 0
        %410 = vmatpush1.bf16.msra.mxu0 0
        %411 = vmatprep.mubr.bf16.mxu0 0
        %412 = vmatmul.mubr.bf16.gmra.mrb[0].mxu0 %v359
        %v413 = vpop.f32.mrb[0].mxu0
        %v414 = vadd.f32 %v309, %v413
        %v415 = vpop.f32.mrb[0].mxu0
        %v416 = vpop.f32.mrb[0].mxu0
        %v417 = vadd.f32 %v309, %v416
        %v418 = vpop.f32.mrb[0].mxu0
        %419 = vmatprep.mubr.bf16.mxu0 0
        %420 = vmatmul.mubr.bf16.gmra.mrb[0].mxu0 %v362
        %v421 = vpop.f32.mrb[0].mxu0
        %v422 = vadd.f32 %v309, %v421
        %v423 = vpop.f32.mrb[0].mxu0
        %v424 = vpop.f32.mrb[0].mxu0
        %v425 = vadd.f32 %v309, %v424
        %v426 = vpop.f32.mrb[0].mxu0
        %427 = vmatprep.mubr.bf16.mxu0 0
        %428 = vmatmul.mubr.bf16.gmra.mrb[0].mxu0 %v365
        %v429 = vpop.f32.mrb[0].mxu0
        %v430 = vadd.f32 %v309, %v429
        %v431 = vpop.f32.mrb[0].mxu0
        %v432 = vpop.f32.mrb[0].mxu0
        %v433 = vadd.f32 %v309, %v432
        %v434 = vpop.f32.mrb[0].mxu0
        %435 = vmatprep.mubr.bf16.mxu0 0
        %436 = vmatmul.mubr.bf16.gmra.mrb[0].mxu0 %v368
        %v437 = vpop.f32.mrb[0].mxu0
        %v438 = vadd.f32 %v309, %v437
        %v439 = vpop.f32.mrb[0].mxu0
        %v440 = vpop.f32.mrb[0].mxu0
        %v441 = vadd.f32 %v309, %v440
        %v442 = vpop.f32.mrb[0].mxu0
        %443 = vmatprep.mubr.bf16.mxu0 0
        %444 = vmatmul.mubr.bf16.gmra.mrb[0].mxu0 %v371
        %v445 = vpop.f32.mrb[0].mxu0
        %v446 = vadd.f32 %v309, %v445
        %v447 = vpop.f32.mrb[0].mxu0
        %v448 = vpop.f32.mrb[0].mxu0
        %v449 = vadd.f32 %v309, %v448
        %v450 = vpop.f32.mrb[0].mxu0
        %451 = vmatprep.mubr.bf16.mxu0 0
        %452 = vmatmul.mubr.bf16.gmra.mrb[0].mxu0 %v374
        %v453 = vpop.f32.mrb[0].mxu0
        %v454 = vadd.f32 %v309, %v453
        %v455 = vpop.f32.mrb[0].mxu0
        %v456 = vpop.f32.mrb[0].mxu0
        %v457 = vadd.f32 %v309, %v456
        %v458 = vpop.f32.mrb[0].mxu0
        %459 = vmatprep.mubr.bf16.mxu0 0
        %460 = vmatmul.mubr.bf16.gmra.mrb[0].mxu0 %v377
        %v461 = vpop.f32.mrb[0].mxu0
        %v462 = vadd.f32 %v309, %v461
        %v463 = vpop.f32.mrb[0].mxu0
        %v464 = vpop.f32.mrb[0].mxu0
        %v465 = vadd.f32 %v309, %v464
        %v466 = vpop.f32.mrb[0].mxu0
        %467 = vdwg.mxu0
        %v468 = vmax.f32 %v414, 0.0
        %v469 = vmax.f32 %v417, 0.0
        %v470 = vmax.f32 %v422, 0.0
        %v471 = vmax.f32 %v425, 0.0
        %v472 = vmax.f32 %v430, 0.0
        %v473 = vmax.f32 %v433, 0.0
        %v474 = vmax.f32 %v438, 0.0
        %v475 = vmax.f32 %v441, 0.0
        %v476 = vmax.f32 %v446, 0.0
        %v477 = vmax.f32 %v449, 0.0
        %v478 = vmax.f32 %v454, 0.0
        %v479 = vmax.f32 %v457, 0.0
        %v480 = vmax.f32 %v462, 0.0
        %v481 = vmax.f32 %v465, 0.0
        %v482 = vpack.c.bf16 %v469, %v468
        %v483 = vpack.c.bf16 %v471, %v470
        %v484 = vpack.c.bf16 %v473, %v472
        %v485 = vpack.c.bf16 %v475, %v474
        %v486 = vpack.c.bf16 %v477, %v476
        %v487 = vpack.c.bf16 %v479, %v478
        %v488 = vpack.c.bf16 %v481, %v480
        %489 = vst.msk [vmem:[#allocation2] sm:$0xff] %vm281, %v482
        %490 = vst.msk [vmem:[#allocation2 + $0x8] sm:$0xff] %vm281, %v483
        %491 = vst.msk [vmem:[#allocation2 + $0x10] sm:$0xff] %vm281, %v484
        %492 = vst.msk [vmem:[#allocation2 + $0x18] sm:$0xff] %vm281, %v485
        %493 = vst.msk [vmem:[#allocation2 + $0x20] sm:$0xff] %vm281, %v486
        %494 = vst.msk [vmem:[#allocation2 + $0x28] sm:$0xff] %vm281, %v487
        %495 = vst.msk [vmem:[#allocation2 + $0x30] sm:$0xff] %vm281, %v488
        %v496 = vld [vmem:[#allocation2] sm:$0xff]
        %v497 = vld [vmem:[#allocation2 + $0x8] sm:$0xff]
        %v498 = vld [vmem:[#allocation2 + $0x10] sm:$0xff]
        %v499 = vld [vmem:[#allocation2 + $0x18] sm:$0xff]
        %v500 = vld [vmem:[#allocation2 + $0x20] sm:$0xff]
        %v501 = vld [vmem:[#allocation2 + $0x28] sm:$0xff]
        %v502 = vld [vmem:[#allocation2 + $0x30] sm:$0xff]
        %503 = vst.msk [vmem:[#allocation5] sm:$0xff] %vm281, %v496
        %504 = vst.msk [vmem:[#allocation5 + $0x10] sm:$0xff] %vm281, %v497
        %505 = vst.msk [vmem:[#allocation5 + $0x20] sm:$0xff] %vm281, %v498
        %506 = vst.msk [vmem:[#allocation5 + $0x30] sm:$0xff] %vm281, %v499
        %507 = vst.msk [vmem:[#allocation5 + $0x40] sm:$0xff] %vm281, %v500
        %508 = vst.msk [vmem:[#allocation5 + $0x50] sm:$0xff] %vm281, %v501
        %509 = vst.msk [vmem:[#allocation5 + $0x60] sm:$0xff] %vm281, %v502
        %v510 = vld [vmem:[#allocation2] sm:$0xff]
        %v511 = vld [vmem:[#allocation2 + $0x8] sm:$0xff]
        %v512 = vld [vmem:[#allocation2 + $0x10] sm:$0xff]
        %v513 = vld [vmem:[#allocation2 + $0x18] sm:$0xff]
        %v514 = vld [vmem:[#allocation2 + $0x20] sm:$0xff]
        %v515 = vld [vmem:[#allocation2 + $0x28] sm:$0xff]
        %v516 = vld [vmem:[#allocation2 + $0x30] sm:$0xff]
        %v517 = vld [vmem:[#allocation2 + $0x38] sm:$0x1]
        %vm518 = vsmask.f32 7424
        %v520 = vshrl.u32 %v510, 16
        %v522 = vshll.u32 %v510, 16
        %v524 = vrot.slane %v522, 1
        %v525 = vor.u32 %v520, %v524
        %v527 = vshll.u32 %v511, 16
        %v529 = vrot.slane %v527, 1
        %v530 = vsel %vm518, %v525, %v529
        %v531 = vshrl.u32 %v511, 16
        %v533 = vor.u32 %v531, %v529
        %v535 = vshll.u32 %v512, 16
        %v537 = vrot.slane %v535, 1
        %v538 = vsel %vm518, %v533, %v537
        %v539 = vshrl.u32 %v512, 16
        %v541 = vor.u32 %v539, %v537
        %v543 = vshll.u32 %v513, 16
        %v545 = vrot.slane %v543, 1
        %v546 = vsel %vm518, %v541, %v545
        %v547 = vshrl.u32 %v513, 16
        %v549 = vor.u32 %v547, %v545
        %v551 = vshll.u32 %v514, 16
        %v553 = vrot.slane %v551, 1
        %v554 = vsel %vm518, %v549, %v553
        %v555 = vshrl.u32 %v514, 16
        %v557 = vor.u32 %v555, %v553
        %v559 = vshll.u32 %v515, 16
        %v561 = vrot.slane %v559, 1
        %v562 = vsel %vm518, %v557, %v561
        %v563 = vshrl.u32 %v515, 16
        %v565 = vor.u32 %v563, %v561
        %v567 = vshll.u32 %v516, 16
        %v569 = vrot.slane %v567, 1
        %v570 = vsel %vm518, %v565, %v569
        %v571 = vshrl.u32 %v516, 16
        %v573 = vor.u32 %v571, %v569
        %v575 = vshll.u32 %v517, 16
        %v577 = vrot.slane %v575, 1
        %v578 = vsel %vm518, %v573, %v577
        %579 = vrot.lane.b32.xlu0 %v530, 16
        %v580 = vpop.permute.xlu0 %579
        %581 = vrot.lane.b32.xlu0 %v538, 16
        %v582 = vpop.permute.xlu0 %581
        %583 = vrot.lane.b32.xlu0 %v546, 16
        %v584 = vpop.permute.xlu0 %583
        %585 = vrot.lane.b32.xlu0 %v554, 16
        %v586 = vpop.permute.xlu0 %585
        %587 = vrot.lane.b32.xlu0 %v562, 16
        %v588 = vpop.permute.xlu0 %587
        %589 = vrot.lane.b32.xlu0 %v570, 16
        %v590 = vpop.permute.xlu0 %589
        %591 = vrot.lane.b32.xlu0 %v578, 16
        %v592 = vpop.permute.xlu0 %591
        %vm600 = vcmask 261248
        %601 = vst.msk [vmem:[#allocation5] sm:$0xff] %vm600, %v580
        %602 = vst.msk [vmem:[#allocation5 + $0x10] sm:$0xff] %vm600, %v582
        %603 = vst.msk [vmem:[#allocation5 + $0x20] sm:$0xff] %vm600, %v584
        %604 = vst.msk [vmem:[#allocation5 + $0x30] sm:$0xff] %vm600, %v586
        %605 = vst.msk [vmem:[#allocation5 + $0x40] sm:$0xff] %vm600, %v588
        %606 = vst.msk [vmem:[#allocation5 + $0x50] sm:$0xff] %vm600, %v590
        %607 = vst.msk [vmem:[#allocation5 + $0x60] sm:$0xff] %vm600, %v592
        %v608 = vld [vmem:[#allocation2] sm:$0xfe]
        %v609 = vld [vmem:[#allocation2 + $0x8] sm:$0xff]
        %v610 = vld [vmem:[#allocation2 + $0x10] sm:$0xff]
        %v611 = vld [vmem:[#allocation2 + $0x18] sm:$0xff]
        %v612 = vld [vmem:[#allocation2 + $0x20] sm:$0xff]
        %v613 = vld [vmem:[#allocation2 + $0x28] sm:$0xff]
        %v614 = vld [vmem:[#allocation2 + $0x30] sm:$0xff]
        %v615 = vld [vmem:[#allocation2 + $0x38] sm:$0x1]
        %vm624 = vcmask 1046528
        %v625 = vrot.slane %v608, 1
        %v626 = vrot.slane %v609, 1
        %v627 = vsel %vm624, %v625, %v626
        %v628 = vrot.slane %v610, 1
        %v629 = vsel %vm624, %v626, %v628
        %v630 = vrot.slane %v611, 1
        %v631 = vsel %vm624, %v628, %v630
        %v632 = vrot.slane %v612, 1
        %v633 = vsel %vm624, %v630, %v632
        %v634 = vrot.slane %v613, 1
        %v635 = vsel %vm624, %v632, %v634
        %v636 = vrot.slane %v614, 1
        %v637 = vsel %vm624, %v634, %v636
        %v638 = vrot.slane %v615, 1
        %v639 = vsel %vm624, %v636, %v638
        %640 = vrot.lane.b32.xlu0 %v627, 32
        %v641 = vpop.permute.xlu0 %640
        %642 = vrot.lane.b32.xlu0 %v629, 32
        %v643 = vpop.permute.xlu0 %642
        %644 = vrot.lane.b32.xlu0 %v631, 32
        %v645 = vpop.permute.xlu0 %644
        %646 = vrot.lane.b32.xlu0 %v633, 32
        %v647 = vpop.permute.xlu0 %646
        %648 = vrot.lane.b32.xlu0 %v635, 32
        %v649 = vpop.permute.xlu0 %648
        %650 = vrot.lane.b32.xlu0 %v637, 32
        %v651 = vpop.permute.xlu0 %650
        %652 = vrot.lane.b32.xlu0 %v639, 32
        %v653 = vpop.permute.xlu0 %652
        %vm661 = vcmask 392448
        %662 = vst.msk [vmem:[#allocation5] sm:$0xff] %vm661, %v641
        %663 = vst.msk [vmem:[#allocation5 + $0x10] sm:$0xff] %vm661, %v643
        %664 = vst.msk [vmem:[#allocation5 + $0x20] sm:$0xff] %vm661, %v645
        %665 = vst.msk [vmem:[#allocation5 + $0x30] sm:$0xff] %vm661, %v647
        %666 = vst.msk [vmem:[#allocation5 + $0x40] sm:$0xff] %vm661, %v649
        %667 = vst.msk [vmem:[#allocation5 + $0x50] sm:$0xff] %vm661, %v651
        %668 = vst.msk [vmem:[#allocation5 + $0x60] sm:$0xff] %vm661, %v653
        %v669 = vld [vmem:[#allocation2] sm:$0xf8]
        %v670 = vld [vmem:[#allocation2 + $0x8] sm:$0xff]
        %v671 = vld [vmem:[#allocation2 + $0x10] sm:$0xff]
        %v672 = vld [vmem:[#allocation2 + $0x18] sm:$0xff]
        %v673 = vld [vmem:[#allocation2 + $0x20] sm:$0xff]
        %v674 = vld [vmem:[#allocation2 + $0x28] sm:$0xff]
        %v675 = vld [vmem:[#allocation2 + $0x30] sm:$0xff]
        %v676 = vld [vmem:[#allocation2 + $0x38] sm:$0xf]
        %vm677 = vsmask.f32 4352
        %v679 = vshrl.u32 %v669, 16
        %v681 = vrot.slane %v679, 3
        %v682 = vshll.u32 %v669, 16
        %v684 = vrot.slane %v682, 4
        %v685 = vor.u32 %v681, %v684
        %v687 = vshrl.u32 %v670, 16
        %v689 = vrot.slane %v687, 3
        %v690 = vshll.u32 %v670, 16
        %v692 = vrot.slane %v690, 4
        %v693 = vor.u32 %v689, %v692
        %v694 = vsel %vm677, %v685, %v693
        %v696 = vshrl.u32 %v671, 16
        %v698 = vrot.slane %v696, 3
        %v699 = vshll.u32 %v671, 16
        %v701 = vrot.slane %v699, 4
        %v702 = vor.u32 %v698, %v701
        %v703 = vsel %vm677, %v693, %v702
        %v705 = vshrl.u32 %v672, 16
        %v707 = vrot.slane %v705, 3
        %v708 = vshll.u32 %v672, 16
        %v710 = vrot.slane %v708, 4
        %v711 = vor.u32 %v707, %v710
        %v712 = vsel %vm677, %v702, %v711
        %v714 = vshrl.u32 %v673, 16
        %v716 = vrot.slane %v714, 3
        %v717 = vshll.u32 %v673, 16
        %v719 = vrot.slane %v717, 4
        %v720 = vor.u32 %v716, %v719
        %v721 = vsel %vm677, %v711, %v720
        %v723 = vshrl.u32 %v674, 16
        %v725 = vrot.slane %v723, 3
        %v726 = vshll.u32 %v674, 16
        %v728 = vrot.slane %v726, 4
        %v729 = vor.u32 %v725, %v728
        %v730 = vsel %vm677, %v720, %v729
        %v732 = vshrl.u32 %v675, 16
        %v734 = vrot.slane %v732, 3
        %v735 = vshll.u32 %v675, 16
        %v737 = vrot.slane %v735, 4
        %v738 = vor.u32 %v734, %v737
        %v739 = vsel %vm677, %v729, %v738
        %v741 = vshrl.u32 %v676, 16
        %v743 = vrot.slane %v741, 3
        %v744 = vshll.u32 %v676, 16
        %v746 = vrot.slane %v744, 4
        %v747 = vor.u32 %v743, %v746
        %v748 = vsel %vm677, %v738, %v747
        %749 = vrot.lane.b32.xlu0 %v694, 48
        %v750 = vpop.permute.xlu0 %749
        %751 = vrot.lane.b32.xlu0 %v703, 48
        %v752 = vpop.permute.xlu0 %751
        %753 = vrot.lane.b32.xlu0 %v712, 48
        %v754 = vpop.permute.xlu0 %753
        %755 = vrot.lane.b32.xlu0 %v721, 48
        %v756 = vpop.permute.xlu0 %755
        %757 = vrot.lane.b32.xlu0 %v730, 48
        %v758 = vpop.permute.xlu0 %757
        %759 = vrot.lane.b32.xlu0 %v739, 48
        %v760 = vpop.permute.xlu0 %759
        %761 = vrot.lane.b32.xlu0 %v748, 48
        %v762 = vpop.permute.xlu0 %761
        %vm770 = vcmask 523648
        %771 = vst.msk [vmem:[#allocation5] sm:$0xff] %vm770, %v750
        %772 = vst.msk [vmem:[#allocation5 + $0x10] sm:$0xff] %vm770, %v752
        %773 = vst.msk [vmem:[#allocation5 + $0x20] sm:$0xff] %vm770, %v754
        %774 = vst.msk [vmem:[#allocation5 + $0x30] sm:$0xff] %vm770, %v756
        %775 = vst.msk [vmem:[#allocation5 + $0x40] sm:$0xff] %vm770, %v758
        %776 = vst.msk [vmem:[#allocation5 + $0x50] sm:$0xff] %vm770, %v760
        %777 = vst.msk [vmem:[#allocation5 + $0x60] sm:$0xff] %vm770, %v762
        %v778 = vld [vmem:[#allocation2] sm:$0xf0]
        %v779 = vld [vmem:[#allocation2 + $0x8] sm:$0xff]
        %v780 = vld [vmem:[#allocation2 + $0x10] sm:$0xff]
        %v781 = vld [vmem:[#allocation2 + $0x18] sm:$0xff]
        %v782 = vld [vmem:[#allocation2 + $0x20] sm:$0xff]
        %v783 = vld [vmem:[#allocation2 + $0x28] sm:$0xff]
        %v784 = vld [vmem:[#allocation2 + $0x30] sm:$0xff]
        %v785 = vld [vmem:[#allocation2 + $0x38] sm:$0xf]
        %vm794 = vcmask 1043456
        %v795 = vrot.slane %v778, 4
        %v796 = vrot.slane %v779, 4
        %v797 = vsel %vm794, %v795, %v796
        %v798 = vrot.slane %v780, 4
        %v799 = vsel %vm794, %v796, %v798
        %v800 = vrot.slane %v781, 4
        %v801 = vsel %vm794, %v798, %v800
        %v802 = vrot.slane %v782, 4
        %v803 = vsel %vm794, %v800, %v802
        %v804 = vrot.slane %v783, 4
        %v805 = vsel %vm794, %v802, %v804
        %v806 = vrot.slane %v784, 4
        %v807 = vsel %vm794, %v804, %v806
        %v808 = vrot.slane %v785, 4
        %v809 = vsel %vm794, %v806, %v808
        %810 = vrot.lane.b32.xlu0 %v797, 64
        %v811 = vpop.permute.xlu0 %810
        %812 = vrot.lane.b32.xlu0 %v799, 64
        %v813 = vpop.permute.xlu0 %812
        %814 = vrot.lane.b32.xlu0 %v801, 64
        %v815 = vpop.permute.xlu0 %814
        %816 = vrot.lane.b32.xlu0 %v803, 64
        %v817 = vpop.permute.xlu0 %816
        %818 = vrot.lane.b32.xlu0 %v805, 64
        %v819 = vpop.permute.xlu0 %818
        %820 = vrot.lane.b32.xlu0 %v807, 64
        %v821 = vpop.permute.xlu0 %820
        %822 = vrot.lane.b32.xlu0 %v809, 64
        %v823 = vpop.permute.xlu0 %822
        %vm831 = vcmask 654848
        %832 = vst.msk [vmem:[#allocation5] sm:$0xff] %vm831, %v811
        %833 = vst.msk [vmem:[#allocation5 + $0x10] sm:$0xff] %vm831, %v813
        %834 = vst.msk [vmem:[#allocation5 + $0x20] sm:$0xff] %vm831, %v815
        %835 = vst.msk [vmem:[#allocation5 + $0x30] sm:$0xff] %vm831, %v817
        %836 = vst.msk [vmem:[#allocation5 + $0x40] sm:$0xff] %vm831, %v819
        %837 = vst.msk [vmem:[#allocation5 + $0x50] sm:$0xff] %vm831, %v821
        %838 = vst.msk [vmem:[#allocation5 + $0x60] sm:$0xff] %vm831, %v823
        %v839 = vld [vmem:[#allocation2] sm:$0xf0]
        %v840 = vld [vmem:[#allocation2 + $0x8] sm:$0xff]
        %v841 = vld [vmem:[#allocation2 + $0x10] sm:$0xff]
        %v842 = vld [vmem:[#allocation2 + $0x18] sm:$0xff]
        %v843 = vld [vmem:[#allocation2 + $0x20] sm:$0xff]
        %v844 = vld [vmem:[#allocation2 + $0x28] sm:$0xff]
        %v845 = vld [vmem:[#allocation2 + $0x30] sm:$0xff]
        %v846 = vld [vmem:[#allocation2 + $0x38] sm:$0x1f]
        %vm847 = vsmask.f32 3328
        %v849 = vshrl.u32 %v839, 16
        %v851 = vrot.slane %v849, 4
        %v852 = vshll.u32 %v839, 16
        %v854 = vrot.slane %v852, 5
        %v855 = vor.u32 %v851, %v854
        %v857 = vshrl.u32 %v840, 16
        %v859 = vrot.slane %v857, 4
        %v860 = vshll.u32 %v840, 16
        %v862 = vrot.slane %v860, 5
        %v863 = vor.u32 %v859, %v862
        %v864 = vsel %vm847, %v855, %v863
        %v866 = vshrl.u32 %v841, 16
        %v868 = vrot.slane %v866, 4
        %v869 = vshll.u32 %v841, 16
        %v871 = vrot.slane %v869, 5
        %v872 = vor.u32 %v868, %v871
        %v873 = vsel %vm847, %v863, %v872
        %v875 = vshrl.u32 %v842, 16
        %v877 = vrot.slane %v875, 4
        %v878 = vshll.u32 %v842, 16
        %v880 = vrot.slane %v878, 5
        %v881 = vor.u32 %v877, %v880
        %v882 = vsel %vm847, %v872, %v881
        %v884 = vshrl.u32 %v843, 16
        %v886 = vrot.slane %v884, 4
        %v887 = vshll.u32 %v843, 16
        %v889 = vrot.slane %v887, 5
        %v890 = vor.u32 %v886, %v889
        %v891 = vsel %vm847, %v881, %v890
        %v893 = vshrl.u32 %v844, 16
        %v895 = vrot.slane %v893, 4
        %v896 = vshll.u32 %v844, 16
        %v898 = vrot.slane %v896, 5
        %v899 = vor.u32 %v895, %v898
        %v900 = vsel %vm847, %v890, %v899
        %v902 = vshrl.u32 %v845, 16
        %v904 = vrot.slane %v902, 4
        %v905 = vshll.u32 %v845, 16
        %v907 = vrot.slane %v905, 5
        %v908 = vor.u32 %v904, %v907
        %v909 = vsel %vm847, %v899, %v908
        %v911 = vshrl.u32 %v846, 16
        %v913 = vrot.slane %v911, 4
        %v914 = vshll.u32 %v846, 16
        %v916 = vrot.slane %v914, 5
        %v917 = vor.u32 %v913, %v916
        %v918 = vsel %vm847, %v908, %v917
        %919 = vrot.lane.b32.xlu0 %v864, 80
        %v920 = vpop.permute.xlu0 %919
        %921 = vrot.lane.b32.xlu0 %v873, 80
        %v922 = vpop.permute.xlu0 %921
        %923 = vrot.lane.b32.xlu0 %v882, 80
        %v924 = vpop.permute.xlu0 %923
        %925 = vrot.lane.b32.xlu0 %v891, 80
        %v926 = vpop.permute.xlu0 %925
        %927 = vrot.lane.b32.xlu0 %v900, 80
        %v928 = vpop.permute.xlu0 %927
        %929 = vrot.lane.b32.xlu0 %v909, 80
        %v930 = vpop.permute.xlu0 %929
        %931 = vrot.lane.b32.xlu0 %v918, 80
        %v932 = vpop.permute.xlu0 %931
        %vm940 = vcmask 786048
        %941 = vst.msk [vmem:[#allocation5] sm:$0xff] %vm940, %v920
        %942 = vst.msk [vmem:[#allocation5 + $0x10] sm:$0xff] %vm940, %v922
        %943 = vst.msk [vmem:[#allocation5 + $0x20] sm:$0xff] %vm940, %v924
        %944 = vst.msk [vmem:[#allocation5 + $0x30] sm:$0xff] %vm940, %v926
        %945 = vst.msk [vmem:[#allocation5 + $0x40] sm:$0xff] %vm940, %v928
        %946 = vst.msk [vmem:[#allocation5 + $0x50] sm:$0xff] %vm940, %v930
        %947 = vst.msk [vmem:[#allocation5 + $0x60] sm:$0xff] %vm940, %v932
        %v948 = vld [vmem:[#allocation2] sm:$0x80]
        %v949 = vld [vmem:[#allocation2 + $0x8] sm:$0xff]
        %v950 = vld [vmem:[#allocation2 + $0x10] sm:$0xff]
        %v951 = vld [vmem:[#allocation2 + $0x18] sm:$0xff]
        %v952 = vld [vmem:[#allocation2 + $0x20] sm:$0xff]
        %v953 = vld [vmem:[#allocation2 + $0x28] sm:$0xff]
        %v954 = vld [vmem:[#allocation2 + $0x30] sm:$0xff]
        %v955 = vld [vmem:[#allocation2 + $0x38] sm:$0x7f]
        %vm964 = vcmask 1040384
        %v965 = vrot.slane %v948, 7
        %v966 = vrot.slane %v949, 7
        %v967 = vsel %vm964, %v965, %v966
        %v968 = vrot.slane %v950, 7
        %v969 = vsel %vm964, %v966, %v968
        %v970 = vrot.slane %v951, 7
        %v971 = vsel %vm964, %v968, %v970
        %v972 = vrot.slane %v952, 7
        %v973 = vsel %vm964, %v970, %v972
        %v974 = vrot.slane %v953, 7
        %v975 = vsel %vm964, %v972, %v974
        %v976 = vrot.slane %v954, 7
        %v977 = vsel %vm964, %v974, %v976
        %v978 = vrot.slane %v955, 7
        %v979 = vsel %vm964, %v976, %v978
        %980 = vrot.lane.b32.xlu0 %v967, 96
        %v981 = vpop.permute.xlu0 %980
        %982 = vrot.lane.b32.xlu0 %v969, 96
        %v983 = vpop.permute.xlu0 %982
        %984 = vrot.lane.b32.xlu0 %v971, 96
        %v985 = vpop.permute.xlu0 %984
        %986 = vrot.lane.b32.xlu0 %v973, 96
        %v987 = vpop.permute.xlu0 %986
        %988 = vrot.lane.b32.xlu0 %v975, 96
        %v989 = vpop.permute.xlu0 %988
        %990 = vrot.lane.b32.xlu0 %v977, 96
        %v991 = vpop.permute.xlu0 %990
        %992 = vrot.lane.b32.xlu0 %v979, 96
        %v993 = vpop.permute.xlu0 %992
        %vm1001 = vcmask 917248
        %1002 = vst.msk [vmem:[#allocation5] sm:$0xff] %vm1001, %v981
        %1003 = vst.msk [vmem:[#allocation5 + $0x10] sm:$0xff] %vm1001, %v983
        %1004 = vst.msk [vmem:[#allocation5 + $0x20] sm:$0xff] %vm1001, %v985
        %1005 = vst.msk [vmem:[#allocation5 + $0x30] sm:$0xff] %vm1001, %v987
        %1006 = vst.msk [vmem:[#allocation5 + $0x40] sm:$0xff] %vm1001, %v989
        %1007 = vst.msk [vmem:[#allocation5 + $0x50] sm:$0xff] %vm1001, %v991
        %1008 = vst.msk [vmem:[#allocation5 + $0x60] sm:$0xff] %vm1001, %v993
        %v1009 = vld [vmem:[#allocation2] sm:$0x80]
        %v1010 = vld [vmem:[#allocation2 + $0x8] sm:$0xff]
        %v1011 = vld [vmem:[#allocation2 + $0x10] sm:$0xff]
        %v1012 = vld [vmem:[#allocation2 + $0x18] sm:$0xff]
        %v1013 = vld [vmem:[#allocation2 + $0x20] sm:$0xff]
        %v1014 = vld [vmem:[#allocation2 + $0x28] sm:$0xff]
        %v1015 = vld [vmem:[#allocation2 + $0x30] sm:$0xff]
        %v1016 = vld [vmem:[#allocation2 + $0x38] sm:$0xff]
        %vm1017 = vsmask.f32 256
        %v1019 = vshrl.u32 %v1009, 16
        %v1021 = vrot.slane %v1019, 7
        %v1023 = vshrl.u32 %v1010, 16
        %v1025 = vrot.slane %v1023, 7
        %v1026 = vshll.u32 %v1010, 16
        %v1028 = vor.u32 %v1025, %v1026
        %v1029 = vsel %vm1017, %v1021, %v1028
        %v1031 = vshrl.u32 %v1011, 16
        %v1033 = vrot.slane %v1031, 7
        %v1034 = vshll.u32 %v1011, 16
        %v1036 = vor.u32 %v1033, %v1034
        %v1037 = vsel %vm1017, %v1025, %v1036
        %v1039 = vshrl.u32 %v1012, 16
        %v1041 = vrot.slane %v1039, 7
        %v1042 = vshll.u32 %v1012, 16
        %v1044 = vor.u32 %v1041, %v1042
        %v1045 = vsel %vm1017, %v1033, %v1044
        %v1047 = vshrl.u32 %v1013, 16
        %v1049 = vrot.slane %v1047, 7
        %v1050 = vshll.u32 %v1013, 16
        %v1052 = vor.u32 %v1049, %v1050
        %v1053 = vsel %vm1017, %v1041, %v1052
        %v1055 = vshrl.u32 %v1014, 16
        %v1057 = vrot.slane %v1055, 7
        %v1058 = vshll.u32 %v1014, 16
        %v1060 = vor.u32 %v1057, %v1058
        %v1061 = vsel %vm1017, %v1049, %v1060
        %v1063 = vshrl.u32 %v1015, 16
        %v1065 = vrot.slane %v1063, 7
        %v1066 = vshll.u32 %v1015, 16
        %v1068 = vor.u32 %v1065, %v1066
        %v1069 = vsel %vm1017, %v1057, %v1068
        %v1071 = vshrl.u32 %v1016, 16
        %v1073 = vrot.slane %v1071, 7
        %v1074 = vshll.u32 %v1016, 16
        %v1076 = vor.u32 %v1073, %v1074
        %v1077 = vsel %vm1017, %v1065, %v1076
        %1078 = vrot.lane.b32.xlu0 %v1029, 112
        %v1079 = vpop.permute.xlu0 %1078
        %1080 = vrot.lane.b32.xlu0 %v1037, 112
        %v1081 = vpop.permute.xlu0 %1080
        %1082 = vrot.lane.b32.xlu0 %v1045, 112
        %v1083 = vpop.permute.xlu0 %1082
        %1084 = vrot.lane.b32.xlu0 %v1053, 112
        %v1085 = vpop.permute.xlu0 %1084
        %1086 = vrot.lane.b32.xlu0 %v1061, 112
        %v1087 = vpop.permute.xlu0 %1086
        %1088 = vrot.lane.b32.xlu0 %v1069, 112
        %v1089 = vpop.permute.xlu0 %1088
        %1090 = vrot.lane.b32.xlu0 %v1077, 112
        %v1091 = vpop.permute.xlu0 %1090
        %vm1099 = vcmask 1048448
        %1100 = vst.msk [vmem:[#allocation5] sm:$0xff] %vm1099, %v1079
        %1101 = vst.msk [vmem:[#allocation5 + $0x10] sm:$0xff] %vm1099, %v1081
        %1102 = vst.msk [vmem:[#allocation5 + $0x20] sm:$0xff] %vm1099, %v1083
        %1103 = vst.msk [vmem:[#allocation5 + $0x30] sm:$0xff] %vm1099, %v1085
        %1104 = vst.msk [vmem:[#allocation5 + $0x40] sm:$0xff] %vm1099, %v1087
        %1105 = vst.msk [vmem:[#allocation5 + $0x50] sm:$0xff] %vm1099, %v1089
        %1106 = vst.msk [vmem:[#allocation5 + $0x60] sm:$0xff] %vm1099, %v1091
        %v1107 = vld [vmem:[#allocation2 + $0x8] sm:$0xff]
        %v1108 = vld [vmem:[#allocation2 + $0x10] sm:$0xff]
        %v1109 = vld [vmem:[#allocation2 + $0x18] sm:$0xff]
        %v1110 = vld [vmem:[#allocation2 + $0x20] sm:$0xff]
        %v1111 = vld [vmem:[#allocation2 + $0x28] sm:$0xff]
        %v1112 = vld [vmem:[#allocation2 + $0x30] sm:$0xff]
        %v1113 = vld [vmem:[#allocation2 + $0x38] sm:$0xff]
        %1114 = vst.msk [vmem:[#allocation5 + $0x8] sm:$0xff] %vm281, %v1107
        %1115 = vst.msk [vmem:[#allocation5 + $0x18] sm:$0xff] %vm281, %v1108
        %1116 = vst.msk [vmem:[#allocation5 + $0x28] sm:$0xff] %vm281, %v1109
        %1117 = vst.msk [vmem:[#allocation5 + $0x38] sm:$0xff] %vm281, %v1110
        %1118 = vst.msk [vmem:[#allocation5 + $0x48] sm:$0xff] %vm281, %v1111
        %1119 = vst.msk [vmem:[#allocation5 + $0x58] sm:$0xff] %vm281, %v1112
        %1120 = vst.msk [vmem:[#allocation5 + $0x68] sm:$0xff] %vm281, %v1113
        %v1121 = vld [vmem:[#allocation5] sm:$0xff]
        %v1122 = vld [vmem:[#allocation5 + $0x8] sm:$0xff]
        %v1123 = vld [vmem:[#allocation5 + $0x10] sm:$0xff]
        %v1124 = vld [vmem:[#allocation5 + $0x18] sm:$0xff]
        %v1125 = vld [vmem:[#allocation5 + $0x20] sm:$0xff]
        %v1126 = vld [vmem:[#allocation5 + $0x28] sm:$0xff]
        %v1127 = vld [vmem:[#allocation5 + $0x30] sm:$0xff]
        %v1128 = vld [vmem:[#allocation5 + $0x38] sm:$0xff]
        %v1129 = vld [vmem:[#allocation5 + $0x40] sm:$0xff]
        %v1130 = vld [vmem:[#allocation5 + $0x48] sm:$0xff]
        %v1131 = vld [vmem:[#allocation5 + $0x50] sm:$0xff]
        %v1132 = vld [vmem:[#allocation5 + $0x58] sm:$0xff]
        %v1133 = vld [vmem:[#allocation5 + $0x60] sm:$0xff]
        %v1134 = vld [vmem:[#allocation5 + $0x68] sm:$0xff]
        %v1135 = vld [vmem:[%s3] sm:$0xf]
        %v1136 = vld [vmem:[%s3 + $0x4] sm:$0xf]
        %v1137 = vld [vmem:[%s3 + $0x8] sm:$0xf]
        %v1138 = vld [vmem:[%s3 + $0xc] sm:$0xf]
        %v1139 = vld [vmem:[%s3 + $0x10] sm:$0xf]
        %v1140 = vld [vmem:[%s3 + $0x14] sm:$0xf]
        %v1141 = vld [vmem:[%s3 + $0x18] sm:$0xf]
        %v1142 = vld [vmem:[%s3 + $0x1c] sm:$0xf]
        %v1143 = vld [vmem:[%s3 + $0x20] sm:$0xf]
        %v1144 = vld [vmem:[%s3 + $0x24] sm:$0xf]
        %v1145 = vld [vmem:[%s3 + $0x28] sm:$0xf]
        %v1146 = vld [vmem:[%s3 + $0x2c] sm:$0xf]
        %v1147 = vld [vmem:[%s3 + $0x30] sm:$0xf]
        %v1148 = vld [vmem:[%s3 + $0x34] sm:$0xf]
        %v1149 = vld [vmem:[%s3 + $0x38] sm:$0xf]
        %v1150 = vld [vmem:[%s3 + $0x3c] sm:$0xf]
        %v1151 = vld [vmem:[%s3 + $0x40] sm:$0xf]
        %v1152 = vld [vmem:[%s3 + $0x44] sm:$0xf]
        %v1153 = vld [vmem:[%s4] sm:$0x1]
        %v1155 = vlaneseq
        %v1156 = vshrl.u32 %v1155, 7
        %v1157 = vsub.s32 0, %v1156
        %v1158 = vrot.slane %v1153, %v1157
        %v1178 = vunpack.c.l.b16 %v1135
        %v1179 = vunpack.c.l.b16 %v1136
        %v1180 = vunpack.c.l.b16 %v1137
        %v1181 = vunpack.c.l.b16 %v1138
        %v1182 = vunpack.c.l.b16 %v1139
        %v1183 = vunpack.c.l.b16 %v1140
        %v1184 = vunpack.c.l.b16 %v1141
        %v1185 = vunpack.c.l.b16 %v1142
        %v1186 = vunpack.c.l.b16 %v1143
        %v1187 = vunpack.c.l.b16 %v1144
        %v1188 = vunpack.c.l.b16 %v1145
        %v1189 = vunpack.c.l.b16 %v1146
        %v1190 = vunpack.c.l.b16 %v1147
        %v1191 = vunpack.c.l.b16 %v1148
        %v1192 = vunpack.c.l.b16 %v1149
        %v1193 = vunpack.c.l.b16 %v1150
        %v1194 = vunpack.c.l.b16 %v1151
        %v1195 = vunpack.c.l.b16 %v1152
        %v1196 = vpack.c.b16 %v1179, %v1178
        %v1197 = vpack.c.b16 %v1181, %v1180
        %v1198 = vpack.c.b16 %v1183, %v1182
        %v1199 = vpack.c.b16 %v1185, %v1184
        %v1200 = vpack.c.b16 %v1187, %v1186
        %v1201 = vpack.c.b16 %v1189, %v1188
        %v1202 = vpack.c.b16 %v1191, %v1190
        %v1203 = vpack.c.b16 %v1193, %v1192
        %v1204 = vpack.c.b16 %v1195, %v1194
        %v1215 = vsel %vm281, %v1122, 0
        %v1218 = vsel %vm281, %v1124, 0
        %v1221 = vsel %vm281, %v1126, 0
        %v1224 = vsel %vm281, %v1128, 0
        %v1227 = vsel %vm281, %v1130, 0
        %v1230 = vsel %vm281, %v1132, 0
        %v1233 = vsel %vm281, %v1134, 0
        %1235 = vmatprep.subr.bf16.mxu0 0
        %1236 = vmatpush1.bf16.msra.mxu0 %v1196
        %1237 = vmatprep.subr.bf16.mxu0 0
        %1238 = vmatpush1.bf16.msra.mxu0 %v1197
        %1239 = vmatprep.subr.bf16.mxu0 0
        %1240 = vmatpush1.bf16.msra.mxu0 %v1198
        %1241 = vmatprep.subr.bf16.mxu0 0
        %1242 = vmatpush1.bf16.msra.mxu0 %v1199
        %1243 = vmatprep.subr.bf16.mxu0 0
        %1244 = vmatpush1.bf16.msra.mxu0 %v1200
        %1245 = vmatprep.subr.bf16.mxu0 0
        %1246 = vmatpush1.bf16.msra.mxu0 %v1201
        %1247 = vmatprep.subr.bf16.mxu0 0
        %1248 = vmatpush1.bf16.msra.mxu0 %v1202
        %1249 = vmatprep.subr.bf16.mxu0 0
        %1250 = vmatpush1.bf16.msra.mxu0 %v1203
        %1251 = vmatprep.subr.bf16.mxu0 0
        %1252 = vmatpush1.bf16.msra.mxu0 %v1204
        %1253 = vmatprep.subr.bf16.mxu0 0
        %1254 = vmatpush1.bf16.msra.mxu0 0
        %1255 = vmatprep.subr.bf16.mxu0 0
        %1256 = vmatpush1.bf16.msra.mxu0 0
        %1257 = vmatprep.subr.bf16.mxu0 0
        %1258 = vmatpush1.bf16.msra.mxu0 0
        %1259 = vmatprep.subr.bf16.mxu0 0
        %1260 = vmatpush1.bf16.msra.mxu0 0
        %1261 = vmatprep.subr.bf16.mxu0 0
        %1262 = vmatpush1.bf16.msra.mxu0 0
        %1263 = vmatprep.subr.bf16.mxu0 0
        %1264 = vmatpush1.bf16.msra.mxu0 0
        %1265 = vmatprep.subr.bf16.mxu0 0
        %1266 = vmatpush1.bf16.msra.mxu0 0
        %1267 = vmatprep.mubr.bf16.mxu0 %v1215
        %1268 = vmatmul.mubr.bf16.gmra.mrb[0].mxu0 %v1121
        %v1269 = vpop.f32.mrb[0].mxu0
        %v1270 = vadd.f32 %v1158, %v1269
        %v1271 = vpop.f32.mrb[0].mxu0
        %v1272 = vpop.f32.mrb[0].mxu0
        %v1273 = vadd.f32 %v1158, %v1272
        %v1274 = vpop.f32.mrb[0].mxu0
        %1275 = vmatprep.mubr.bf16.mxu0 %v1218
        %1276 = vmatmul.mubr.bf16.gmra.mrb[0].mxu0 %v1123
        %v1277 = vpop.f32.mrb[0].mxu0
        %v1278 = vadd.f32 %v1158, %v1277
        %v1279 = vpop.f32.mrb[0].mxu0
        %v1280 = vpop.f32.mrb[0].mxu0
        %v1281 = vadd.f32 %v1158, %v1280
        %v1282 = vpop.f32.mrb[0].mxu0
        %1283 = vmatprep.mubr.bf16.mxu0 %v1221
        %1284 = vmatmul.mubr.bf16.gmra.mrb[0].mxu0 %v1125
        %v1285 = vpop.f32.mrb[0].mxu0
        %v1286 = vadd.f32 %v1158, %v1285
        %v1287 = vpop.f32.mrb[0].mxu0
        %v1288 = vpop.f32.mrb[0].mxu0
        %v1289 = vadd.f32 %v1158, %v1288
        %v1290 = vpop.f32.mrb[0].mxu0
        %1291 = vmatprep.mubr.bf16.mxu0 %v1224
        %1292 = vmatmul.mubr.bf16.gmra.mrb[0].mxu0 %v1127
        %v1293 = vpop.f32.mrb[0].mxu0
        %v1294 = vadd.f32 %v1158, %v1293
        %v1295 = vpop.f32.mrb[0].mxu0
        %v1296 = vpop.f32.mrb[0].mxu0
        %v1297 = vadd.f32 %v1158, %v1296
        %v1298 = vpop.f32.mrb[0].mxu0
        %1299 = vmatprep.mubr.bf16.mxu0 %v1227
        %1300 = vmatmul.mubr.bf16.gmra.mrb[0].mxu0 %v1129
        %v1301 = vpop.f32.mrb[0].mxu0
        %v1302 = vadd.f32 %v1158, %v1301
        %v1303 = vpop.f32.mrb[0].mxu0
        %v1304 = vpop.f32.mrb[0].mxu0
        %v1305 = vadd.f32 %v1158, %v1304
        %v1306 = vpop.f32.mrb[0].mxu0
        %1307 = vmatprep.mubr.bf16.mxu0 %v1230
        %1308 = vmatmul.mubr.bf16.gmra.mrb[0].mxu0 %v1131
        %v1309 = vpop.f32.mrb[0].mxu0
        %v1310 = vadd.f32 %v1158, %v1309
        %v1311 = vpop.f32.mrb[0].mxu0
        %v1312 = vpop.f32.mrb[0].mxu0
        %v1313 = vadd.f32 %v1158, %v1312
        %v1314 = vpop.f32.mrb[0].mxu0
        %1315 = vmatprep.mubr.bf16.mxu0 %v1233
        %1316 = vmatmul.mubr.bf16.gmra.mrb[0].mxu0 %v1133
        %v1317 = vpop.f32.mrb[0].mxu0
        %v1318 = vadd.f32 %v1158, %v1317
        %v1319 = vpop.f32.mrb[0].mxu0
        %v1320 = vpop.f32.mrb[0].mxu0
        %v1321 = vadd.f32 %v1158, %v1320
        %v1322 = vpop.f32.mrb[0].mxu0
        %1323 = vdwg.mxu0
        %v1324 = vmax.f32 %v1270, 0.0
        %v1325 = vmax.f32 %v1273, 0.0
        %v1326 = vmax.f32 %v1278, 0.0
        %v1327 = vmax.f32 %v1281, 0.0
        %v1328 = vmax.f32 %v1286, 0.0
        %v1329 = vmax.f32 %v1289, 0.0
        %v1330 = vmax.f32 %v1294, 0.0
        %v1331 = vmax.f32 %v1297, 0.0
        %v1332 = vmax.f32 %v1302, 0.0
        %v1333 = vmax.f32 %v1305, 0.0
        %v1334 = vmax.f32 %v1310, 0.0
        %v1335 = vmax.f32 %v1313, 0.0
        %v1336 = vmax.f32 %v1318, 0.0
        %v1337 = vmax.f32 %v1321, 0.0
        %v1338 = vpack.c.bf16 %v1325, %v1324
        %v1339 = vpack.c.bf16 %v1327, %v1326
        %v1340 = vpack.c.bf16 %v1329, %v1328
        %v1341 = vpack.c.bf16 %v1331, %v1330
        %v1342 = vpack.c.bf16 %v1333, %v1332
        %v1343 = vpack.c.bf16 %v1335, %v1334
        %v1344 = vpack.c.bf16 %v1337, %v1336
        %1345 = vst.msk [vmem:[#allocation3] sm:$0xff] %vm283, %v1338
        %1346 = vst.msk [vmem:[#allocation3 + $0x8] sm:$0xff] %vm283, %v1339
        %1347 = vst.msk [vmem:[#allocation3 + $0x10] sm:$0xff] %vm283, %v1340
        %1348 = vst.msk [vmem:[#allocation3 + $0x18] sm:$0xff] %vm283, %v1341
        %1349 = vst.msk [vmem:[#allocation3 + $0x20] sm:$0xff] %vm283, %v1342
        %1350 = vst.msk [vmem:[#allocation3 + $0x28] sm:$0xff] %vm283, %v1343
        %1351 = vst.msk [vmem:[#allocation3 + $0x30] sm:$0xff] %vm283, %v1344
        %v1352 = vld [vmem:[#allocation3] sm:$0xff]
        %v1353 = vld [vmem:[#allocation3 + $0x8] sm:$0xff]
        %v1354 = vld [vmem:[#allocation3 + $0x10] sm:$0xff]
        %v1355 = vld [vmem:[#allocation3 + $0x18] sm:$0xff]
        %v1356 = vld [vmem:[#allocation3 + $0x20] sm:$0xff]
        %v1357 = vld [vmem:[#allocation3 + $0x28] sm:$0xff]
        %v1358 = vld [vmem:[#allocation3 + $0x30] sm:$0xff]
        %1359 = vst.msk [vmem:[#allocation6] sm:$0xff] %vm283, %v1352
        %1360 = vst.msk [vmem:[#allocation6 + $0x18] sm:$0xff] %vm283, %v1353
        %1361 = vst.msk [vmem:[#allocation6 + $0x30] sm:$0xff] %vm283, %v1354
        %1362 = vst.msk [vmem:[#allocation6 + $0x48] sm:$0xff] %vm283, %v1355
        %1363 = vst.msk [vmem:[#allocation6 + $0x60] sm:$0xff] %vm283, %v1356
        %1364 = vst.msk [vmem:[#allocation6 + $0x78] sm:$0xff] %vm283, %v1357
        %1365 = vst.msk [vmem:[#allocation6 + $0x90] sm:$0xff] %vm283, %v1358
        %v1366 = vld [vmem:[#allocation3] sm:$0xfe]
        %v1367 = vld [vmem:[#allocation3 + $0x8] sm:$0xff]
        %v1368 = vld [vmem:[#allocation3 + $0x10] sm:$0xff]
        %v1369 = vld [vmem:[#allocation3 + $0x18] sm:$0xff]
        %v1370 = vld [vmem:[#allocation3 + $0x20] sm:$0xff]
        %v1371 = vld [vmem:[#allocation3 + $0x28] sm:$0xff]
        %v1372 = vld [vmem:[#allocation3 + $0x30] sm:$0xff]
        %v1373 = vld [vmem:[#allocation3 + $0x38] sm:$0x1]
        %v1382 = vrot.slane %v1366, 1
        %v1383 = vrot.slane %v1367, 1
        %v1384 = vsel %vm624, %v1382, %v1383
        %v1385 = vrot.slane %v1368, 1
        %v1386 = vsel %vm624, %v1383, %v1385
        %v1387 = vrot.slane %v1369, 1
        %v1388 = vsel %vm624, %v1385, %v1387
        %v1389 = vrot.slane %v1370, 1
        %v1390 = vsel %vm624, %v1387, %v1389
        %v1391 = vrot.slane %v1371, 1
        %v1392 = vsel %vm624, %v1389, %v1391
        %v1393 = vrot.slane %v1372, 1
        %v1394 = vsel %vm624, %v1391, %v1393
        %v1395 = vrot.slane %v1373, 1
        %v1396 = vsel %vm624, %v1393, %v1395
        %1397 = vrot.lane.b32.xlu0 %v1384, 32
        %v1398 = vpop.permute.xlu0 %1397
        %1399 = vrot.lane.b32.xlu0 %v1386, 32
        %v1400 = vpop.permute.xlu0 %1399
        %1401 = vrot.lane.b32.xlu0 %v1388, 32
        %v1402 = vpop.permute.xlu0 %1401
        %1403 = vrot.lane.b32.xlu0 %v1390, 32
        %v1404 = vpop.permute.xlu0 %1403
        %1405 = vrot.lane.b32.xlu0 %v1392, 32
        %v1406 = vpop.permute.xlu0 %1405
        %1407 = vrot.lane.b32.xlu0 %v1394, 32
        %v1408 = vpop.permute.xlu0 %1407
        %1409 = vrot.lane.b32.xlu0 %v1396, 32
        %v1410 = vpop.permute.xlu0 %1409
        %vm1418 = vcmask 523520
        %1419 = vst.msk [vmem:[#allocation6] sm:$0xff] %vm1418, %v1398
        %1420 = vst.msk [vmem:[#allocation6 + $0x18] sm:$0xff] %vm1418, %v1400
        %1421 = vst.msk [vmem:[#allocation6 + $0x30] sm:$0xff] %vm1418, %v1402
        %1422 = vst.msk [vmem:[#allocation6 + $0x48] sm:$0xff] %vm1418, %v1404
        %1423 = vst.msk [vmem:[#allocation6 + $0x60] sm:$0xff] %vm1418, %v1406
        %1424 = vst.msk [vmem:[#allocation6 + $0x78] sm:$0xff] %vm1418, %v1408
        %1425 = vst.msk [vmem:[#allocation6 + $0x90] sm:$0xff] %vm1418, %v1410
        %v1426 = vld [vmem:[#allocation3] sm:$0xfc]
        %v1427 = vld [vmem:[#allocation3 + $0x8] sm:$0xff]
        %v1428 = vld [vmem:[#allocation3 + $0x10] sm:$0xff]
        %v1429 = vld [vmem:[#allocation3 + $0x18] sm:$0xff]
        %v1430 = vld [vmem:[#allocation3 + $0x20] sm:$0xff]
        %v1431 = vld [vmem:[#allocation3 + $0x28] sm:$0xff]
        %v1432 = vld [vmem:[#allocation3 + $0x30] sm:$0xff]
        %v1433 = vld [vmem:[#allocation3 + $0x38] sm:$0x3]
        %vm1442 = vcmask 1045504
        %v1443 = vrot.slane %v1426, 2
        %v1444 = vrot.slane %v1427, 2
        %v1445 = vsel %vm1442, %v1443, %v1444
        %v1446 = vrot.slane %v1428, 2
        %v1447 = vsel %vm1442, %v1444, %v1446
        %v1448 = vrot.slane %v1429, 2
        %v1449 = vsel %vm1442, %v1446, %v1448
        %v1450 = vrot.slane %v1430, 2
        %v1451 = vsel %vm1442, %v1448, %v1450
        %v1452 = vrot.slane %v1431, 2
        %v1453 = vsel %vm1442, %v1450, %v1452
        %v1454 = vrot.slane %v1432, 2
        %v1455 = vsel %vm1442, %v1452, %v1454
        %v1456 = vrot.slane %v1433, 2
        %v1457 = vsel %vm1442, %v1454, %v1456
        %1458 = vrot.lane.b32.xlu0 %v1445, 64
        %v1459 = vpop.permute.xlu0 %1458
        %1460 = vrot.lane.b32.xlu0 %v1447, 64
        %v1461 = vpop.permute.xlu0 %1460
        %1462 = vrot.lane.b32.xlu0 %v1449, 64
        %v1463 = vpop.permute.xlu0 %1462
        %1464 = vrot.lane.b32.xlu0 %v1451, 64
        %v1465 = vpop.permute.xlu0 %1464
        %1466 = vrot.lane.b32.xlu0 %v1453, 64
        %v1467 = vpop.permute.xlu0 %1466
        %1468 = vrot.lane.b32.xlu0 %v1455, 64
        %v1469 = vpop.permute.xlu0 %1468
        %1470 = vrot.lane.b32.xlu0 %v1457, 64
        %v1471 = vpop.permute.xlu0 %1470
        %vm1479 = vcmask 785920
        %1480 = vst.msk [vmem:[#allocation6] sm:$0xff] %vm1479, %v1459
        %1481 = vst.msk [vmem:[#allocation6 + $0x18] sm:$0xff] %vm1479, %v1461
        %1482 = vst.msk [vmem:[#allocation6 + $0x30] sm:$0xff] %vm1479, %v1463
        %1483 = vst.msk [vmem:[#allocation6 + $0x48] sm:$0xff] %vm1479, %v1465
        %1484 = vst.msk [vmem:[#allocation6 + $0x60] sm:$0xff] %vm1479, %v1467
        %1485 = vst.msk [vmem:[#allocation6 + $0x78] sm:$0xff] %vm1479, %v1469
        %1486 = vst.msk [vmem:[#allocation6 + $0x90] sm:$0xff] %vm1479, %v1471
        %v1487 = vld [vmem:[#allocation3] sm:$0x80]
        %v1488 = vld [vmem:[#allocation3 + $0x8] sm:$0xff]
        %v1489 = vld [vmem:[#allocation3 + $0x10] sm:$0xff]
        %v1490 = vld [vmem:[#allocation3 + $0x18] sm:$0xff]
        %v1491 = vld [vmem:[#allocation3 + $0x20] sm:$0xff]
        %v1492 = vld [vmem:[#allocation3 + $0x28] sm:$0xff]
        %v1493 = vld [vmem:[#allocation3 + $0x30] sm:$0xff]
        %v1494 = vld [vmem:[#allocation3 + $0x38] sm:$0x7f]
        %v1503 = vrot.slane %v1487, 7
        %v1504 = vrot.slane %v1488, 7
        %v1505 = vsel %vm964, %v1503, %v1504
        %v1506 = vrot.slane %v1489, 7
        %v1507 = vsel %vm964, %v1504, %v1506
        %v1508 = vrot.slane %v1490, 7
        %v1509 = vsel %vm964, %v1506, %v1508
        %v1510 = vrot.slane %v1491, 7
        %v1511 = vsel %vm964, %v1508, %v1510
        %v1512 = vrot.slane %v1492, 7
        %v1513 = vsel %vm964, %v1510, %v1512
        %v1514 = vrot.slane %v1493, 7
        %v1515 = vsel %vm964, %v1512, %v1514
        %v1516 = vrot.slane %v1494, 7
        %v1517 = vsel %vm964, %v1514, %v1516
        %1518 = vrot.lane.b32.xlu0 %v1505, 96
        %v1519 = vpop.permute.xlu0 %1518
        %1520 = vrot.lane.b32.xlu0 %v1507, 96
        %v1521 = vpop.permute.xlu0 %1520
        %1522 = vrot.lane.b32.xlu0 %v1509, 96
        %v1523 = vpop.permute.xlu0 %1522
        %1524 = vrot.lane.b32.xlu0 %v1511, 96
        %v1525 = vpop.permute.xlu0 %1524
        %1526 = vrot.lane.b32.xlu0 %v1513, 96
        %v1527 = vpop.permute.xlu0 %1526
        %1528 = vrot.lane.b32.xlu0 %v1515, 96
        %v1529 = vpop.permute.xlu0 %1528
        %1530 = vrot.lane.b32.xlu0 %v1517, 96
        %v1531 = vpop.permute.xlu0 %1530
        %vm1539 = vcmask 1048320
        %1540 = vst.msk [vmem:[#allocation6] sm:$0xff] %vm1539, %v1519
        %1541 = vst.msk [vmem:[#allocation6 + $0x18] sm:$0xff] %vm1539, %v1521
        %1542 = vst.msk [vmem:[#allocation6 + $0x30] sm:$0xff] %vm1539, %v1523
        %1543 = vst.msk [vmem:[#allocation6 + $0x48] sm:$0xff] %vm1539, %v1525
        %1544 = vst.msk [vmem:[#allocation6 + $0x60] sm:$0xff] %vm1539, %v1527
        %1545 = vst.msk [vmem:[#allocation6 + $0x78] sm:$0xff] %vm1539, %v1529
        %1546 = vst.msk [vmem:[#allocation6 + $0x90] sm:$0xff] %vm1539, %v1531
        %v1547 = vld [vmem:[#allocation3 + $0x8] sm:$0xff]
        %v1548 = vld [vmem:[#allocation3 + $0x10] sm:$0xff]
        %v1549 = vld [vmem:[#allocation3 + $0x18] sm:$0xff]
        %v1550 = vld [vmem:[#allocation3 + $0x20] sm:$0xff]
        %v1551 = vld [vmem:[#allocation3 + $0x28] sm:$0xff]
        %v1552 = vld [vmem:[#allocation3 + $0x30] sm:$0xff]
        %v1553 = vld [vmem:[#allocation3 + $0x38] sm:$0xff]
        %1554 = vst.msk [vmem:[#allocation6 + $0x8] sm:$0xff] %vm283, %v1547
        %1555 = vst.msk [vmem:[#allocation6 + $0x20] sm:$0xff] %vm283, %v1548
        %1556 = vst.msk [vmem:[#allocation6 + $0x38] sm:$0xff] %vm283, %v1549
        %1557 = vst.msk [vmem:[#allocation6 + $0x50] sm:$0xff] %vm283, %v1550
        %1558 = vst.msk [vmem:[#allocation6 + $0x68] sm:$0xff] %vm283, %v1551
        %1559 = vst.msk [vmem:[#allocation6 + $0x80] sm:$0xff] %vm283, %v1552
        %1560 = vst.msk [vmem:[#allocation6 + $0x98] sm:$0xff] %vm283, %v1553
        %v1561 = vld [vmem:[#allocation3 + $0x8] sm:$0xfe]
        %v1562 = vld [vmem:[#allocation3 + $0x10] sm:$0xff]
        %v1563 = vld [vmem:[#allocation3 + $0x18] sm:$0xff]
        %v1564 = vld [vmem:[#allocation3 + $0x20] sm:$0xff]
        %v1565 = vld [vmem:[#allocation3 + $0x28] sm:$0xff]
        %v1566 = vld [vmem:[#allocation3 + $0x30] sm:$0xff]
        %v1567 = vld [vmem:[#allocation3 + $0x38] sm:$0xff]
        %v1568 = vld [vmem:[#allocation3 + $0x40] sm:$0x1]
        %v1577 = vrot.slane %v1561, 1
        %v1578 = vrot.slane %v1562, 1
        %v1579 = vsel %vm624, %v1577, %v1578
        %v1580 = vrot.slane %v1563, 1
        %v1581 = vsel %vm624, %v1578, %v1580
        %v1582 = vrot.slane %v1564, 1
        %v1583 = vsel %vm624, %v1580, %v1582
        %v1584 = vrot.slane %v1565, 1
        %v1585 = vsel %vm624, %v1582, %v1584
        %v1586 = vrot.slane %v1566, 1
        %v1587 = vsel %vm624, %v1584, %v1586
        %v1588 = vrot.slane %v1567, 1
        %v1589 = vsel %vm624, %v1586, %v1588
        %v1590 = vrot.slane %v1568, 1
        %v1591 = vsel %vm624, %v1588, %v1590
        %1592 = vrot.lane.b32.xlu0 %v1579, 32
        %v1593 = vpop.permute.xlu0 %1592
        %1594 = vrot.lane.b32.xlu0 %v1581, 32
        %v1595 = vpop.permute.xlu0 %1594
        %1596 = vrot.lane.b32.xlu0 %v1583, 32
        %v1597 = vpop.permute.xlu0 %1596
        %1598 = vrot.lane.b32.xlu0 %v1585, 32
        %v1599 = vpop.permute.xlu0 %1598
        %1600 = vrot.lane.b32.xlu0 %v1587, 32
        %v1601 = vpop.permute.xlu0 %1600
        %1602 = vrot.lane.b32.xlu0 %v1589, 32
        %v1603 = vpop.permute.xlu0 %1602
        %1604 = vrot.lane.b32.xlu0 %v1591, 32
        %v1605 = vpop.permute.xlu0 %1604
        %1613 = vst.msk [vmem:[#allocation6 + $0x8] sm:$0xff] %vm1418, %v1593
        %1614 = vst.msk [vmem:[#allocation6 + $0x20] sm:$0xff] %vm1418, %v1595
        %1615 = vst.msk [vmem:[#allocation6 + $0x38] sm:$0xff] %vm1418, %v1597
        %1616 = vst.msk [vmem:[#allocation6 + $0x50] sm:$0xff] %vm1418, %v1599
        %1617 = vst.msk [vmem:[#allocation6 + $0x68] sm:$0xff] %vm1418, %v1601
        %1618 = vst.msk [vmem:[#allocation6 + $0x80] sm:$0xff] %vm1418, %v1603
        %1619 = vst.msk [vmem:[#allocation6 + $0x98] sm:$0xff] %vm1418, %v1605
        %v1620 = vld [vmem:[#allocation3 + $0x8] sm:$0xc0]
        %v1621 = vld [vmem:[#allocation3 + $0x10] sm:$0xff]
        %v1622 = vld [vmem:[#allocation3 + $0x18] sm:$0xff]
        %v1623 = vld [vmem:[#allocation3 + $0x20] sm:$0xff]
        %v1624 = vld [vmem:[#allocation3 + $0x28] sm:$0xff]
        %v1625 = vld [vmem:[#allocation3 + $0x30] sm:$0xff]
        %v1626 = vld [vmem:[#allocation3 + $0x38] sm:$0xff]
        %v1627 = vld [vmem:[#allocation3 + $0x40] sm:$0x3f]
        %vm1636 = vcmask 1041408
        %v1637 = vrot.slane %v1620, 6
        %v1638 = vrot.slane %v1621, 6
        %v1639 = vsel %vm1636, %v1637, %v1638
        %v1640 = vrot.slane %v1622, 6
        %v1641 = vsel %vm1636, %v1638, %v1640
        %v1642 = vrot.slane %v1623, 6
        %v1643 = vsel %vm1636, %v1640, %v1642
        %v1644 = vrot.slane %v1624, 6
        %v1645 = vsel %vm1636, %v1642, %v1644
        %v1646 = vrot.slane %v1625, 6
        %v1647 = vsel %vm1636, %v1644, %v1646
        %v1648 = vrot.slane %v1626, 6
        %v1649 = vsel %vm1636, %v1646, %v1648
        %v1650 = vrot.slane %v1627, 6
        %v1651 = vsel %vm1636, %v1648, %v1650
        %1652 = vrot.lane.b32.xlu0 %v1639, 64
        %v1653 = vpop.permute.xlu0 %1652
        %1654 = vrot.lane.b32.xlu0 %v1641, 64
        %v1655 = vpop.permute.xlu0 %1654
        %1656 = vrot.lane.b32.xlu0 %v1643, 64
        %v1657 = vpop.permute.xlu0 %1656
        %1658 = vrot.lane.b32.xlu0 %v1645, 64
        %v1659 = vpop.permute.xlu0 %1658
        %1660 = vrot.lane.b32.xlu0 %v1647, 64
        %v1661 = vpop.permute.xlu0 %1660
        %1662 = vrot.lane.b32.xlu0 %v1649, 64
        %v1663 = vpop.permute.xlu0 %1662
        %1664 = vrot.lane.b32.xlu0 %v1651, 64
        %v1665 = vpop.permute.xlu0 %1664
        %1673 = vst.msk [vmem:[#allocation6 + $0x8] sm:$0xff] %vm1479, %v1653
        %1674 = vst.msk [vmem:[#allocation6 + $0x20] sm:$0xff] %vm1479, %v1655
        %1675 = vst.msk [vmem:[#allocation6 + $0x38] sm:$0xff] %vm1479, %v1657
        %1676 = vst.msk [vmem:[#allocation6 + $0x50] sm:$0xff] %vm1479, %v1659
        %1677 = vst.msk [vmem:[#allocation6 + $0x68] sm:$0xff] %vm1479, %v1661
        %1678 = vst.msk [vmem:[#allocation6 + $0x80] sm:$0xff] %vm1479, %v1663
        %1679 = vst.msk [vmem:[#allocation6 + $0x98] sm:$0xff] %vm1479, %v1665
        %v1680 = vld [vmem:[#allocation3 + $0x8] sm:$0x80]
        %v1681 = vld [vmem:[#allocation3 + $0x10] sm:$0xff]
        %v1682 = vld [vmem:[#allocation3 + $0x18] sm:$0xff]
        %v1683 = vld [vmem:[#allocation3 + $0x20] sm:$0xff]
        %v1684 = vld [vmem:[#allocation3 + $0x28] sm:$0xff]
        %v1685 = vld [vmem:[#allocation3 + $0x30] sm:$0xff]
        %v1686 = vld [vmem:[#allocation3 + $0x38] sm:$0xff]
        %v1687 = vld [vmem:[#allocation3 + $0x40] sm:$0x7f]
        %v1696 = vrot.slane %v1680, 7
        %v1697 = vrot.slane %v1681, 7
        %v1698 = vsel %vm964, %v1696, %v1697
        %v1699 = vrot.slane %v1682, 7
        %v1700 = vsel %vm964, %v1697, %v1699
        %v1701 = vrot.slane %v1683, 7
        %v1702 = vsel %vm964, %v1699, %v1701
        %v1703 = vrot.slane %v1684, 7
        %v1704 = vsel %vm964, %v1701, %v1703
        %v1705 = vrot.slane %v1685, 7
        %v1706 = vsel %vm964, %v1703, %v1705
        %v1707 = vrot.slane %v1686, 7
        %v1708 = vsel %vm964, %v1705, %v1707
        %v1709 = vrot.slane %v1687, 7
        %v1710 = vsel %vm964, %v1707, %v1709
        %1711 = vrot.lane.b32.xlu0 %v1698, 96
        %v1712 = vpop.permute.xlu0 %1711
        %1713 = vrot.lane.b32.xlu0 %v1700, 96
        %v1714 = vpop.permute.xlu0 %1713
        %1715 = vrot.lane.b32.xlu0 %v1702, 96
        %v1716 = vpop.permute.xlu0 %1715
        %1717 = vrot.lane.b32.xlu0 %v1704, 96
        %v1718 = vpop.permute.xlu0 %1717
        %1719 = vrot.lane.b32.xlu0 %v1706, 96
        %v1720 = vpop.permute.xlu0 %1719
        %1721 = vrot.lane.b32.xlu0 %v1708, 96
        %v1722 = vpop.permute.xlu0 %1721
        %1723 = vrot.lane.b32.xlu0 %v1710, 96
        %v1724 = vpop.permute.xlu0 %1723
        %1732 = vst.msk [vmem:[#allocation6 + $0x8] sm:$0xff] %vm1539, %v1712
        %1733 = vst.msk [vmem:[#allocation6 + $0x20] sm:$0xff] %vm1539, %v1714
        %1734 = vst.msk [vmem:[#allocation6 + $0x38] sm:$0xff] %vm1539, %v1716
        %1735 = vst.msk [vmem:[#allocation6 + $0x50] sm:$0xff] %vm1539, %v1718
        %1736 = vst.msk [vmem:[#allocation6 + $0x68] sm:$0xff] %vm1539, %v1720
        %1737 = vst.msk [vmem:[#allocation6 + $0x80] sm:$0xff] %vm1539, %v1722
        %1738 = vst.msk [vmem:[#allocation6 + $0x98] sm:$0xff] %vm1539, %v1724
        %v1739 = vld [vmem:[#allocation3 + $0x10] sm:$0xff]
        %v1740 = vld [vmem:[#allocation3 + $0x18] sm:$0xff]
        %v1741 = vld [vmem:[#allocation3 + $0x20] sm:$0xff]
        %v1742 = vld [vmem:[#allocation3 + $0x28] sm:$0xff]
        %v1743 = vld [vmem:[#allocation3 + $0x30] sm:$0xff]
        %v1744 = vld [vmem:[#allocation3 + $0x38] sm:$0xff]
        %v1745 = vld [vmem:[#allocation3 + $0x40] sm:$0xff]
        %1746 = vst.msk [vmem:[#allocation6 + $0x10] sm:$0xff] %vm283, %v1739
        %1747 = vst.msk [vmem:[#allocation6 + $0x28] sm:$0xff] %vm283, %v1740
        %1748 = vst.msk [vmem:[#allocation6 + $0x40] sm:$0xff] %vm283, %v1741
        %1749 = vst.msk [vmem:[#allocation6 + $0x58] sm:$0xff] %vm283, %v1742
        %1750 = vst.msk [vmem:[#allocation6 + $0x70] sm:$0xff] %vm283, %v1743
        %1751 = vst.msk [vmem:[#allocation6 + $0x88] sm:$0xff] %vm283, %v1744
        %1752 = vst.msk [vmem:[#allocation6 + $0xa0] sm:$0xff] %vm283, %v1745
        %v1753 = vld [vmem:[#allocation6] sm:$0xff]
        %v1754 = vld [vmem:[#allocation6 + $0x8] sm:$0xff]
        %v1755 = vld [vmem:[#allocation6 + $0x10] sm:$0xff]
        %v1756 = vld [vmem:[#allocation6 + $0x18] sm:$0xff]
        %v1757 = vld [vmem:[#allocation6 + $0x20] sm:$0xff]
        %v1758 = vld [vmem:[#allocation6 + $0x28] sm:$0xff]
        %v1759 = vld [vmem:[#allocation6 + $0x30] sm:$0xff]
        %v1760 = vld [vmem:[#allocation6 + $0x38] sm:$0xff]
        %v1761 = vld [vmem:[#allocation6 + $0x40] sm:$0xff]
        %v1762 = vld [vmem:[#allocation6 + $0x48] sm:$0xff]
        %v1763 = vld [vmem:[#allocation6 + $0x50] sm:$0xff]
        %v1764 = vld [vmem:[#allocation6 + $0x58] sm:$0xff]
        %v1765 = vld [vmem:[#allocation6 + $0x60] sm:$0xff]
        %v1766 = vld [vmem:[#allocation6 + $0x68] sm:$0xff]
        %v1767 = vld [vmem:[#allocation6 + $0x70] sm:$0xff]
        %v1768 = vld [vmem:[#allocation6 + $0x78] sm:$0xff]
        %v1769 = vld [vmem:[#allocation6 + $0x80] sm:$0xff]
        %v1770 = vld [vmem:[#allocation6 + $0x88] sm:$0xff]
        %v1771 = vld [vmem:[#allocation6 + $0x90] sm:$0xff]
        %v1772 = vld [vmem:[#allocation6 + $0x98] sm:$0xff]
        %v1773 = vld [vmem:[#allocation6 + $0xa0] sm:$0xff]
        %v1774 = vld [vmem:[%s5] sm:$0xf]
        %v1775 = vld [vmem:[%s5 + $0x4] sm:$0xf]
        %v1776 = vld [vmem:[%s5 + $0x8] sm:$0xf]
        %v1777 = vld [vmem:[%s5 + $0xc] sm:$0xf]
        %v1778 = vld [vmem:[%s5 + $0x10] sm:$0xf]
        %v1779 = vld [vmem:[%s5 + $0x14] sm:$0xf]
        %v1780 = vld [vmem:[%s5 + $0x18] sm:$0xf]
        %v1781 = vld [vmem:[%s5 + $0x1c] sm:$0xf]
        %v1782 = vld [vmem:[%s5 + $0x20] sm:$0xf]
        %v1783 = vld [vmem:[%s5 + $0x24] sm:$0xf]
        %v1784 = vld [vmem:[%s5 + $0x28] sm:$0xf]
        %v1785 = vld [vmem:[%s5 + $0x2c] sm:$0xf]
        %v1786 = vld [vmem:[%s5 + $0x30] sm:$0xf]
        %v1787 = vld [vmem:[%s5 + $0x34] sm:$0xf]
        %v1788 = vld [vmem:[%s5 + $0x38] sm:$0xf]
        %v1789 = vld [vmem:[%s5 + $0x3c] sm:$0xf]
        %v1790 = vld [vmem:[%s5 + $0x40] sm:$0xf]
        %v1791 = vld [vmem:[%s5 + $0x44] sm:$0xf]
        %v1792 = vld [vmem:[%s5 + $0x48] sm:$0xf]
        %v1793 = vld [vmem:[%s5 + $0x4c] sm:$0xf]
        %v1794 = vld [vmem:[%s5 + $0x50] sm:$0xf]
        %v1795 = vld [vmem:[%s5 + $0x54] sm:$0xf]
        %v1796 = vld [vmem:[%s5 + $0x58] sm:$0xf]
        %v1797 = vld [vmem:[%s5 + $0x5c] sm:$0xf]
        %v1798 = vld [vmem:[%s5 + $0x60] sm:$0xf]
        %v1799 = vld [vmem:[%s5 + $0x64] sm:$0xf]
        %v1800 = vld [vmem:[%s5 + $0x68] sm:$0xf]
        %v1801 = vld [vmem:[%s5 + $0x6c] sm:$0xf]
        %v1802 = vld [vmem:[%s5 + $0x70] sm:$0xf]
        %v1803 = vld [vmem:[%s5 + $0x74] sm:$0xf]
        %v1804 = vld [vmem:[%s5 + $0x78] sm:$0xf]
        %v1805 = vld [vmem:[%s5 + $0x7c] sm:$0xf]
        %v1806 = vld [vmem:[%s5 + $0x80] sm:$0xf]
        %v1807 = vld [vmem:[%s5 + $0x84] sm:$0xf]
        %v1808 = vld [vmem:[%s5 + $0x88] sm:$0xf]
        %v1809 = vld [vmem:[%s5 + $0x8c] sm:$0xf]
        %v1810 = vld [vmem:[%s6] sm:$0x1]
        %v1812 = vlaneseq
        %v1813 = vshrl.u32 %v1812, 7
        %v1814 = vsub.s32 0, %v1813
        %v1815 = vrot.slane %v1810, %v1814
        %v1853 = vunpack.c.l.b16 %v1774
        %v1854 = vunpack.c.l.b16 %v1775
        %v1855 = vunpack.c.l.b16 %v1776
        %v1856 = vunpack.c.l.b16 %v1777
        %v1857 = vunpack.c.l.b16 %v1778
        %v1858 = vunpack.c.l.b16 %v1779
        %v1859 = vunpack.c.l.b16 %v1780
        %v1860 = vunpack.c.l.b16 %v1781
        %v1861 = vunpack.c.l.b16 %v1782
        %v1862 = vunpack.c.l.b16 %v1783
        %v1863 = vunpack.c.l.b16 %v1784
        %v1864 = vunpack.c.l.b16 %v1785
        %v1865 = vunpack.c.l.b16 %v1786
        %v1866 = vunpack.c.l.b16 %v1787
        %v1867 = vunpack.c.l.b16 %v1788
        %v1868 = vunpack.c.l.b16 %v1789
        %v1869 = vunpack.c.l.b16 %v1790
        %v1870 = vunpack.c.l.b16 %v1791
        %v1871 = vunpack.c.l.b16 %v1792
        %v1872 = vunpack.c.l.b16 %v1793
        %v1873 = vunpack.c.l.b16 %v1794
        %v1874 = vunpack.c.l.b16 %v1795
        %v1875 = vunpack.c.l.b16 %v1796
        %v1876 = vunpack.c.l.b16 %v1797
        %v1877 = vunpack.c.l.b16 %v1798
        %v1878 = vunpack.c.l.b16 %v1799
        %v1879 = vunpack.c.l.b16 %v1800
        %v1880 = vunpack.c.l.b16 %v1801
        %v1881 = vunpack.c.l.b16 %v1802
        %v1882 = vunpack.c.l.b16 %v1803
        %v1883 = vunpack.c.l.b16 %v1804
        %v1884 = vunpack.c.l.b16 %v1805
        %v1885 = vunpack.c.l.b16 %v1806
        %v1886 = vunpack.c.l.b16 %v1807
        %v1887 = vunpack.c.l.b16 %v1808
        %v1888 = vunpack.c.l.b16 %v1809
        %v1889 = vpack.c.b16 %v1854, %v1853
        %v1890 = vpack.c.b16 %v1856, %v1855
        %v1891 = vpack.c.b16 %v1858, %v1857
        %v1892 = vpack.c.b16 %v1860, %v1859
        %v1893 = vpack.c.b16 %v1862, %v1861
        %v1894 = vpack.c.b16 %v1864, %v1863
        %v1895 = vpack.c.b16 %v1866, %v1865
        %v1896 = vpack.c.b16 %v1868, %v1867
        %v1897 = vpack.c.b16 %v1870, %v1869
        %v1898 = vpack.c.b16 %v1872, %v1871
        %v1899 = vpack.c.b16 %v1874, %v1873
        %v1900 = vpack.c.b16 %v1876, %v1875
        %v1901 = vpack.c.b16 %v1878, %v1877
        %v1902 = vpack.c.b16 %v1880, %v1879
        %v1903 = vpack.c.b16 %v1882, %v1881
        %v1904 = vpack.c.b16 %v1884, %v1883
        %v1905 = vpack.c.b16 %v1886, %v1885
        %v1906 = vpack.c.b16 %v1888, %v1887
        %v1926 = vsel %vm283, %v1755, 0
        %v1929 = vsel %vm283, %v1758, 0
        %v1932 = vsel %vm283, %v1761, 0
        %v1935 = vsel %vm283, %v1764, 0
        %v1938 = vsel %vm283, %v1767, 0
        %v1941 = vsel %vm283, %v1770, 0
        %v1944 = vsel %vm283, %v1773, 0
        %1946 = vmatprep.subr.bf16.mxu0 0
        %1947 = vmatpush1.bf16.msra.mxu0 %v1889
        %1948 = vmatprep.subr.bf16.mxu0 0
        %1949 = vmatpush1.bf16.msra.mxu0 %v1890
        %1950 = vmatprep.subr.bf16.mxu0 0
        %1951 = vmatpush1.bf16.msra.mxu0 %v1891
        %1952 = vmatprep.subr.bf16.mxu0 0
        %1953 = vmatpush1.bf16.msra.mxu0 %v1892
        %1954 = vmatprep.subr.bf16.mxu0 0
        %1955 = vmatpush1.bf16.msra.mxu0 %v1893
        %1956 = vmatprep.subr.bf16.mxu0 0
        %1957 = vmatpush1.bf16.msra.mxu0 %v1894
        %1958 = vmatprep.subr.bf16.mxu0 0
        %1959 = vmatpush1.bf16.msra.mxu0 %v1895
        %1960 = vmatprep.subr.bf16.mxu0 0
        %1961 = vmatpush1.bf16.msra.mxu0 %v1896
        %1962 = vmatprep.subr.bf16.mxu0 0
        %1963 = vmatpush1.bf16.msra.mxu0 %v1897
        %1964 = vmatprep.subr.bf16.mxu0 0
        %1965 = vmatpush1.bf16.msra.mxu0 %v1898
        %1966 = vmatprep.subr.bf16.mxu0 0
        %1967 = vmatpush1.bf16.msra.mxu0 %v1899
        %1968 = vmatprep.subr.bf16.mxu0 0
        %1969 = vmatpush1.bf16.msra.mxu0 %v1900
        %1970 = vmatprep.subr.bf16.mxu0 0
        %1971 = vmatpush1.bf16.msra.mxu0 %v1901
        %1972 = vmatprep.subr.bf16.mxu0 0
        %1973 = vmatpush1.bf16.msra.mxu0 %v1902
        %1974 = vmatprep.subr.bf16.mxu0 0
        %1975 = vmatpush1.bf16.msra.mxu0 %v1903
        %1976 = vmatprep.subr.bf16.mxu0 0
        %1977 = vmatpush1.bf16.msra.mxu0 %v1904
        %1978 = vmatprep.mubr.bf16.mxu0 %v1754
        %1979 = vmatmul.mubr.bf16.gmra.mrb[0].mxu0 %v1753
        %v1980 = vpop.f32.mrb[0].mxu0
        %v1981 = vadd.f32 %v1815, %v1980
        %v1982 = vpop.f32.mrb[0].mxu0
        %v1983 = vpop.f32.mrb[0].mxu0
        %v1984 = vadd.f32 %v1815, %v1983
        %v1985 = vpop.f32.mrb[0].mxu0
        %1986 = vmatprep.mubr.bf16.mxu0 %v1757
        %1987 = vmatmul.mubr.bf16.gmra.mrb[0].mxu0 %v1756
        %v1988 = vpop.f32.mrb[0].mxu0
        %v1989 = vadd.f32 %v1815, %v1988
        %v1990 = vpop.f32.mrb[0].mxu0
        %v1991 = vpop.f32.mrb[0].mxu0
        %v1992 = vadd.f32 %v1815, %v1991
        %v1993 = vpop.f32.mrb[0].mxu0
        %1994 = vmatprep.mubr.bf16.mxu0 %v1760
        %1995 = vmatmul.mubr.bf16.gmra.mrb[0].mxu0 %v1759
        %v1996 = vpop.f32.mrb[0].mxu0
        %v1997 = vadd.f32 %v1815, %v1996
        %v1998 = vpop.f32.mrb[0].mxu0
        %v1999 = vpop.f32.mrb[0].mxu0
        %v2000 = vadd.f32 %v1815, %v1999
        %v2001 = vpop.f32.mrb[0].mxu0
        %2002 = vmatprep.mubr.bf16.mxu0 %v1763
        %2003 = vmatmul.mubr.bf16.gmra.mrb[0].mxu0 %v1762
        %v2004 = vpop.f32.mrb[0].mxu0
        %v2005 = vadd.f32 %v1815, %v2004
        %v2006 = vpop.f32.mrb[0].mxu0
        %v2007 = vpop.f32.mrb[0].mxu0
        %v2008 = vadd.f32 %v1815, %v2007
        %v2009 = vpop.f32.mrb[0].mxu0
        %2010 = vmatprep.mubr.bf16.mxu0 %v1766
        %2011 = vmatmul.mubr.bf16.gmra.mrb[0].mxu0 %v1765
        %v2012 = vpop.f32.mrb[0].mxu0
        %v2013 = vadd.f32 %v1815, %v2012
        %v2014 = vpop.f32.mrb[0].mxu0
        %v2015 = vpop.f32.mrb[0].mxu0
        %v2016 = vadd.f32 %v1815, %v2015
        %v2017 = vpop.f32.mrb[0].mxu0
        %2018 = vmatprep.mubr.bf16.mxu0 %v1769
        %2019 = vmatmul.mubr.bf16.gmra.mrb[0].mxu0 %v1768
        %v2020 = vpop.f32.mrb[0].mxu0
        %v2021 = vadd.f32 %v1815, %v2020
        %v2022 = vpop.f32.mrb[0].mxu0
        %v2023 = vpop.f32.mrb[0].mxu0
        %v2024 = vadd.f32 %v1815, %v2023
        %v2025 = vpop.f32.mrb[0].mxu0
        %2026 = vmatprep.mubr.bf16.mxu0 %v1772
        %2027 = vmatmul.mubr.bf16.gmra.mrb[0].mxu0 %v1771
        %v2028 = vpop.f32.mrb[0].mxu0
        %v2029 = vadd.f32 %v1815, %v2028
        %v2030 = vpop.f32.mrb[0].mxu0
        %v2031 = vpop.f32.mrb[0].mxu0
        %v2032 = vadd.f32 %v1815, %v2031
        %v2033 = vpop.f32.mrb[0].mxu0
        %2034 = vdwg.mxu0
        %2035 = vmatprep.subr.bf16.mxu0 0
        %2036 = vmatpush1.bf16.msra.mxu0 %v1905
        %2037 = vmatprep.subr.bf16.mxu0 0
        %2038 = vmatpush1.bf16.msra.mxu0 %v1906
        %2039 = vmatprep.subr.bf16.mxu0 0
        %2040 = vmatpush1.bf16.msra.mxu0 0
        %2041 = vmatprep.subr.bf16.mxu0 0
        %2042 = vmatpush1.bf16.msra.mxu0 0
        %2043 = vmatprep.subr.bf16.mxu0 0
        %2044 = vmatpush1.bf16.msra.mxu0 0
        %2045 = vmatprep.subr.bf16.mxu0 0
        %2046 = vmatpush1.bf16.msra.mxu0 0
        %2047 = vmatprep.subr.bf16.mxu0 0
        %2048 = vmatpush1.bf16.msra.mxu0 0
        %2049 = vmatprep.subr.bf16.mxu0 0
        %2050 = vmatpush1.bf16.msra.mxu0 0
        %2051 = vmatprep.subr.bf16.mxu0 0
        %2052 = vmatpush1.bf16.msra.mxu0 0
        %2053 = vmatprep.subr.bf16.mxu0 0
        %2054 = vmatpush1.bf16.msra.mxu0 0
        %2055 = vmatprep.subr.bf16.mxu0 0
        %2056 = vmatpush1.bf16.msra.mxu0 0
        %2057 = vmatprep.subr.bf16.mxu0 0
        %2058 = vmatpush1.bf16.msra.mxu0 0
        %2059 = vmatprep.subr.bf16.mxu0 0
        %2060 = vmatpush1.bf16.msra.mxu0 0
        %2061 = vmatprep.subr.bf16.mxu0 0
        %2062 = vmatpush1.bf16.msra.mxu0 0
        %2063 = vmatprep.subr.bf16.mxu0 0
        %2064 = vmatpush1.bf16.msra.mxu0 0
        %2065 = vmatprep.subr.bf16.mxu0 0
        %2066 = vmatpush1.bf16.msra.mxu0 0
        %2067 = vmatprep.mubr.bf16.mxu0 0
        %2068 = vmatmul.mubr.bf16.gmra.mrb[0].mxu0 %v1926
        %v2069 = vpop.f32.mrb[0].mxu0
        %v2070 = vadd.f32 %v1981, %v2069
        %v2071 = vpop.f32.mrb[0].mxu0
        %v2072 = vpop.f32.mrb[0].mxu0
        %v2073 = vadd.f32 %v1984, %v2072
        %v2074 = vpop.f32.mrb[0].mxu0
        %2075 = vmatprep.mubr.bf16.mxu0 0
        %2076 = vmatmul.mubr.bf16.gmra.mrb[0].mxu0 %v1929
        %v2077 = vpop.f32.mrb[0].mxu0
        %v2078 = vadd.f32 %v1989, %v2077
        %v2079 = vpop.f32.mrb[0].mxu0
        %v2080 = vpop.f32.mrb[0].mxu0
        %v2081 = vadd.f32 %v1992, %v2080
        %v2082 = vpop.f32.mrb[0].mxu0
        %2083 = vmatprep.mubr.bf16.mxu0 0
        %2084 = vmatmul.mubr.bf16.gmra.mrb[0].mxu0 %v1932
        %v2085 = vpop.f32.mrb[0].mxu0
        %v2086 = vadd.f32 %v1997, %v2085
        %v2087 = vpop.f32.mrb[0].mxu0
        %v2088 = vpop.f32.mrb[0].mxu0
        %v2089 = vadd.f32 %v2000, %v2088
        %v2090 = vpop.f32.mrb[0].mxu0
        %2091 = vmatprep.mubr.bf16.mxu0 0
        %2092 = vmatmul.mubr.bf16.gmra.mrb[0].mxu0 %v1935
        %v2093 = vpop.f32.mrb[0].mxu0
        %v2094 = vadd.f32 %v2005, %v2093
        %v2095 = vpop.f32.mrb[0].mxu0
        %v2096 = vpop.f32.mrb[0].mxu0
        %v2097 = vadd.f32 %v2008, %v2096
        %v2098 = vpop.f32.mrb[0].mxu0
        %2099 = vmatprep.mubr.bf16.mxu0 0
        %2100 = vmatmul.mubr.bf16.gmra.mrb[0].mxu0 %v1938
        %v2101 = vpop.f32.mrb[0].mxu0
        %v2102 = vadd.f32 %v2013, %v2101
        %v2103 = vpop.f32.mrb[0].mxu0
        %v2104 = vpop.f32.mrb[0].mxu0
        %v2105 = vadd.f32 %v2016, %v2104
        %v2106 = vpop.f32.mrb[0].mxu0
        %2107 = vmatprep.mubr.bf16.mxu0 0
        %2108 = vmatmul.mubr.bf16.gmra.mrb[0].mxu0 %v1941
        %v2109 = vpop.f32.mrb[0].mxu0
        %v2110 = vadd.f32 %v2021, %v2109
        %v2111 = vpop.f32.mrb[0].mxu0
        %v2112 = vpop.f32.mrb[0].mxu0
        %v2113 = vadd.f32 %v2024, %v2112
        %v2114 = vpop.f32.mrb[0].mxu0
        %2115 = vmatprep.mubr.bf16.mxu0 0
        %2116 = vmatmul.mubr.bf16.gmra.mrb[0].mxu0 %v1944
        %v2117 = vpop.f32.mrb[0].mxu0
        %v2118 = vadd.f32 %v2029, %v2117
        %v2119 = vpop.f32.mrb[0].mxu0
        %v2120 = vpop.f32.mrb[0].mxu0
        %v2121 = vadd.f32 %v2032, %v2120
        %v2122 = vpop.f32.mrb[0].mxu0
        %2123 = vdwg.mxu0
        %v2124 = vmax.f32 %v2070, 0.0
        %v2125 = vmax.f32 %v2073, 0.0
        %v2126 = vmax.f32 %v2078, 0.0
        %v2127 = vmax.f32 %v2081, 0.0
        %v2128 = vmax.f32 %v2086, 0.0
        %v2129 = vmax.f32 %v2089, 0.0
        %v2130 = vmax.f32 %v2094, 0.0
        %v2131 = vmax.f32 %v2097, 0.0
        %v2132 = vmax.f32 %v2102, 0.0
        %v2133 = vmax.f32 %v2105, 0.0
        %v2134 = vmax.f32 %v2110, 0.0
        %v2135 = vmax.f32 %v2113, 0.0
        %v2136 = vmax.f32 %v2118, 0.0
        %v2137 = vmax.f32 %v2121, 0.0
        %vm2138 = vcmask 523264
        %2139 = vst.msk [vmem:[#allocation4] sm:$0xff] %vm2138, %v2124
        %2140 = vst.msk [vmem:[#allocation4 + $0x8] sm:$0xff] %vm2138, %v2125
        %2141 = vst.msk [vmem:[#allocation4 + $0x10] sm:$0xff] %vm2138, %v2126
        %2142 = vst.msk [vmem:[#allocation4 + $0x18] sm:$0xff] %vm2138, %v2127
        %2143 = vst.msk [vmem:[#allocation4 + $0x20] sm:$0xff] %vm2138, %v2128
        %2144 = vst.msk [vmem:[#allocation4 + $0x28] sm:$0xff] %vm2138, %v2129
        %2145 = vst.msk [vmem:[#allocation4 + $0x30] sm:$0xff] %vm2138, %v2130
        %2146 = vst.msk [vmem:[#allocation4 + $0x38] sm:$0xff] %vm2138, %v2131
        %2147 = vst.msk [vmem:[#allocation4 + $0x40] sm:$0xff] %vm2138, %v2132
        %2148 = vst.msk [vmem:[#allocation4 + $0x48] sm:$0xff] %vm2138, %v2133
        %2149 = vst.msk [vmem:[#allocation4 + $0x50] sm:$0xff] %vm2138, %v2134
        %2150 = vst.msk [vmem:[#allocation4 + $0x58] sm:$0xff] %vm2138, %v2135
        %2151 = vst.msk [vmem:[#allocation4 + $0x60] sm:$0xff] %vm2138, %v2136
        %2152 = vst.msk [vmem:[#allocation4 + $0x68] sm:$0xff] %vm2138, %v2137
        %v2153 = vld [vmem:[#allocation4] sm:$0x1]
        %vm2154 = vcmask 516096
        %2155 = vst.msk [vmem:[%s272] sm:$0x1] %vm2154, %v2153
        %v2156 = vld [vmem:[#allocation4 + $0x38] sm:$0x1]
        %s2157 = scalar_lea.vmem %s272, 1 [#allocation7]
        %2158 = vst.msk [vmem:[%s2157] sm:$0x1] %vm2154, %v2156
        %s2159 = sand.u32 %s181, 1
        %s2160 = scalar_lea.sflag [#allocation8], %s2159
        %s2161 = sand.u32 %s181, 1
        %s2162 = smul.addr %s2161, 2
        %s2163 = scalar_lea.vmem [#allocation7], %s2162
        // Predicated region
        $region49: #{cnn_forward.1} parent=47 // pred_check
          %p2164 = pneg %p191
        $region50: #{cnn_forward.1} parent=47 // pred_check_branch
          %2166 = sbr.rel (%p2164) target = $region52
        $region51: #{cnn_forward.1} parent=47 // pred_region
          %s2167 = smul.u32 2, %s21
          %s2169 = ssub.s32 32, 32
          %2170 = vsyncadd %s2160, %s2169
          %s2171 = smul.addr %s2167, 16
          %s2172 = scalar_lea.hbm %s7, %s2171
          %s2173 = sshll.u32 %s2163, 4
          %s2174 = int_to_ptr.vmem [resolvable:$true] %s2173
          %2179 = dma.vmem_to_hbm [thread:$0]  %s2174, 32, %s2172, %s2160, 16, 16, 1
        $region52: #{cnn_forward.1} parent=47 // pred_fallthru
          _
      $region48: #{cnn_forward.1} parent=5 // pred_fallthru
        _
      %p2180 = scmp.le.s32.totalorder 2, %s16
      // Predicated region
      $region53: #{cnn_forward.1} parent=5 // pred_check
        %p2181 = pneg %p2180
      $region54: #{cnn_forward.1} parent=5 // pred_check_branch
        %2183 = sbr.rel (%p2181) target = $region56
      $region55: #{cnn_forward.1} parent=5 // pred_region
        %s2184 = ssub.s32 %s16, 2
        // Predicated region
        $region57: #{cnn_forward.1} parent=55 // pred_check
          %p2185 = pneg %p197
        $region58: #{cnn_forward.1} parent=55 // pred_check_branch
          %2187 = sbr.rel (%p2185) target = $region60
        $region59: #{cnn_forward.1} parent=55 // pred_region
          %s2188 = sand.u32 %s182, 1
          %s2189 = scalar_lea.sflag [#allocation8], %s2188
          %s2190 = sand.u32 %s182, 1
          %s2191 = smul.addr %s2190, 2
          %s2192 = scalar_lea.vmem [#allocation7], %s2191
          %2193 = dma.done %s2189, 32
        $region60: #{cnn_forward.1} parent=55 // pred_fallthru
          _
      $region56: #{cnn_forward.1} parent=5 // pred_fallthru
        _
    $region6: #{cnn_forward.1} parent=1 // loop_footer
      %s20 = sadd.s32 1, %s16
    $region7: #{cnn_forward.1} parent=1 // loop_footer_branch
      %15 = sbr.rel target = $region3
    $region8: #{cnn_forward.1} parent=1 // loop_exit
      _
    %2194 = vsyncpa [#allocation8], 1
    %s2195 = scalar_lea.sflag [#allocation8], 1
    %2196 = vsyncpa %s2195, 1

</llo_original>
